<compile_context>
chip_gen: v7x
topology: tpu7x:2x2x1
jax: 0.10.0
libtpu: 0.0.40
codegen_flags: <defaults>
</compile_context>

<pallas_src>
import functools

import jax
import jax.numpy as jnp
from jax import lax
from jax.experimental import pallas as pl
from jax.experimental.pallas import tpu as pltpu


def _round_up(x, m):
    return (x + m - 1) // m * m


def _vmem_capacity_bytes():
    try:
        return int(pltpu.get_tpu_info().vmem_capacity_bytes)
    except Exception:
        return 64 * 1024 * 1024  # conservative fallback (v7x per-core VMEM)


def _choose_time_chunk(T, btile, hp, op, vmem_cap):
    """Largest time chunk whose (double-buffered, bf16) x block fits the budget."""
    fixed = (2 * (hp * hp * 2)        # W_hh^T bf16 (worst case double-buffered)
             + 2 * (hp * op * 2)      # W_fc^T bf16
             + 2 * (8 * op * 4)       # b_fc (padded row)
             + btile * hp * 4         # hidden-state scratch
             + 2 * btile * op * 4)    # resident output block
    budget = max(0, int(vmem_cap * 0.5) - fixed)
    per_step = 2 * btile * hp * 2     # 2 buffers x (btile, hp) bf16 per time step
    return max(1, min(T, budget // max(per_step, 1)))


def _rnn_kernel(x_ref, whh_ref, wfc_ref, bfc_ref, out_ref, h_scratch,
                *, tc, rem, unroll):
    """Grid = (batch_tile, time_chunk).  Time axis is the serial recurrence.

    x_ref     : (tc, btile, Hp) bf16  pre-projected embeddings (x@W_ih^T + b)
    whh_ref   : (Hp, Hp)        bf16  W_hh^T
    wfc_ref   : (Hp, Op)        bf16  W_fc^T
    bfc_ref   : (1, Op)         f32   b_fc
    out_ref   : (btile, Op)     f32   logits for this batch tile (last chunk)
    h_scratch : (btile, Hp)     f32   hidden state, persists across chunks
    """
    c = pl.program_id(1)
    last = pl.num_programs(1) - 1

    @pl.when(c == 0)
    def _():
        h_scratch[...] = jnp.zeros_like(h_scratch)

    def run(nsteps):
        def step(t, h):
            x_t = x_ref[t].astype(jnp.float32)                  # (btile, Hp)
            hh = jnp.dot(h.astype(jnp.bfloat16), whh_ref[...],
                         preferred_element_type=jnp.float32)
            return jnp.tanh(x_t + hh)
        return lax.fori_loop(0, nsteps, step, h_scratch[...],
                             unroll=min(unroll, nsteps))

    @pl.when(c != last)
    def _():
        h_scratch[...] = run(tc)

    @pl.when(c == last)
    def _():
        h_final = run(rem)            # only the true remainder; padded steps skipped
        h_scratch[...] = h_final
        out_ref[...] = (
            jnp.dot(h_final.astype(jnp.bfloat16), wfc_ref[...],
                    preferred_element_type=jnp.float32)
            + bfc_ref[...]
        ).astype(out_ref.dtype)


def simple_rnn_forward(x_ids, params):
    """x_ids: (B, T) int32 token ids. Returns (B, O) f32 logits."""
    emb = params["embedding"]          # (V, H)
    w_ih_t = params["w_ih_t"]          # (H, H)
    w_hh_t = params["w_hh_t"]          # (H, H)
    b_ih = params["b_ih"]              # (1, H)
    b_hh = params["b_hh"]              # (1, H)
    w_fc_t = params["w_fc_t"]          # (H, O)
    b_fc = params["b_fc"]              # (1, O)

    B, T = x_ids.shape
    H = emb.shape[1]
    O = w_fc_t.shape[1]

    # Pad to vreg-friendly shapes: batch -> 8 sublanes, H/O -> 128 lanes.
    Bp = _round_up(B, 8)
    Hp = _round_up(H, 128)
    Op = _round_up(O, 128)

    # Fold the input projection + both rnn biases into the embedding table
    # (lookup-then-linear == lookup into the projected table).  f32 compute,
    # then pad lanes and cast to bf16 for the kernel.
    emb_proj = emb @ w_ih_t + (b_ih + b_hh)                        # (V, H) f32
    emb_proj = jnp.pad(emb_proj, ((0, 0), (0, Hp - H))).astype(jnp.bfloat16)

    whh_p = jnp.pad(w_hh_t, ((0, Hp - H), (0, Hp - H))).astype(jnp.bfloat16)
    wfc_p = jnp.pad(w_fc_t, ((0, Hp - H), (0, Op - O))).astype(jnp.bfloat16)
    bfc_p = jnp.pad(b_fc, ((0, 0), (0, Op - O))).astype(jnp.float32)

    # Batch tiling: 2 tiles when the padded batch splits evenly, so v7x's two
    # TensorCores each take half the batch (size-1 parallel axis otherwise).
    n_btiles = 2 if (Bp >= 16 and Bp % 16 == 0) else 1
    btile = Bp // n_btiles

    vmem_cap = _vmem_capacity_bytes()
    tc = _choose_time_chunk(T, btile, Hp, Op, vmem_cap)
    n_chunks = pl.cdiv(T, tc)
    rem = T - (n_chunks - 1) * tc                 # static remainder, in (0, tc]
    T_pad = n_chunks * tc

    # Gather directly in time-major order (no HBM->HBM transpose), pad batch
    # and time.  Padded batch rows stay exactly zero through the recurrence;
    # padded trailing time steps are skipped in the kernel.
    x_tm = jnp.take(emb_proj, x_ids.T, axis=0)                    # (T, B, Hp) bf16
    x_tm = jnp.pad(x_tm, ((0, T_pad - T), (0, Bp - B), (0, 0)))   # (T_pad, Bp, Hp)

    kernel = functools.partial(_rnn_kernel, tc=tc, rem=rem, unroll=8)

    grid_spec = pltpu.PrefetchScalarGridSpec(
        num_scalar_prefetch=0,
        grid=(n_btiles, n_chunks),
        in_specs=[
            pl.BlockSpec((tc, btile, Hp), lambda b, c: (c, b, 0)),   # x chunk
            pl.BlockSpec((Hp, Hp), lambda b, c: (0, 0)),             # W_hh^T
            pl.BlockSpec((Hp, Op), lambda b, c: (0, 0)),             # W_fc^T
            pl.BlockSpec((1, Op), lambda b, c: (0, 0)),              # b_fc
        ],
        out_specs=pl.BlockSpec((btile, Op), lambda b, c: (b, 0)),    # resident out
        scratch_shapes=[pltpu.VMEM((btile, Hp), jnp.float32)],       # hidden state
    )

    # Real footprint: double-buffered x block + (worst-case double-buffered)
    # weights + scratch + output, plus slack for compiler internals.
    usage = (2 * tc * btile * Hp * 2
             + 2 * (Hp * Hp * 2 + Hp * Op * 2 + 8 * Op * 4)
             + btile * Hp * 4 + 2 * btile * Op * 4)
    vmem_limit = min(int(0.9 * vmem_cap), max(usage + (4 << 20), 16 << 20))

    cost = pl.CostEstimate(
        flops=2 * T * Bp * Hp * Hp + 2 * Bp * Hp * Op,
        transcendentals=T * Bp * Hp,
        bytes_accessed=(2 * T_pad * Bp * Hp + 2 * Hp * Hp + 2 * Hp * Op
                        + 4 * Op + 4 * Bp * Op),
    )

    out_padded = pl.pallas_call(
        kernel,
        out_shape=jax.ShapeDtypeStruct((Bp, Op), jnp.float32),
        grid_spec=grid_spec,
        compiler_params=pltpu.CompilerParams(
            dimension_semantics=("parallel", "arbitrary"),  # batch ∥, time serial
            vmem_limit_bytes=vmem_limit,
        ),
        cost_estimate=cost,
    )(x_tm, whh_p, wfc_p, bfc_p)

    return out_padded[:B, :O]


def make_params(key, vocab_size, hidden_size, output_size):
    ks = jax.random.split(key, 7)
    scale = 0.1
    emb = scale * jax.random.normal(ks[0], (vocab_size, hidden_size), jnp.float32)
    w_ih = scale * jax.random.normal(ks[1], (hidden_size, hidden_size), jnp.float32)
    w_hh = scale * jax.random.normal(ks[2], (hidden_size, hidden_size), jnp.float32)
    b_ih = scale * jax.random.normal(ks[3], (hidden_size,), jnp.float32)
    b_hh = scale * jax.random.normal(ks[4], (hidden_size,), jnp.float32)
    w_fc = scale * jax.random.normal(ks[5], (output_size, hidden_size), jnp.float32)
    b_fc = scale * jax.random.normal(ks[6], (output_size,), jnp.float32)
    return {
        "embedding": emb,
        "w_ih_t": w_ih.T,                 # transposed for right-multiply
        "w_hh_t": w_hh.T,
        "b_ih": b_ih.reshape(1, hidden_size),
        "b_hh": b_hh.reshape(1, hidden_size),
        "w_fc_t": w_fc.T,
        "b_fc": b_fc.reshape(1, output_size),
    }


def reference_forward(x_ids, params):
    """Pure-JAX f32 reference matching torch semantics (tanh RNN, final hidden -> fc)."""
    embedded = jnp.take(params["embedding"], x_ids, axis=0)  # (B, T, H)
    B, T, H = embedded.shape

    def step(h, x_t):
        h_new = jnp.tanh(x_t @ params["w_ih_t"] + h @ params["w_hh_t"]
                         + params["b_ih"] + params["b_hh"])
        return h_new, None

    h0 = jnp.zeros((B, H), jnp.float32)
    h_final, _ = jax.lax.scan(step, h0, jnp.transpose(embedded, (1, 0, 2)))
    return h_final @ params["w_fc_t"] + params["b_fc"]


if __name__ == "__main__":
    key = jax.random.PRNGKey(0)
    k_params, k_ids = jax.random.split(key)

    vocab_size = 16      # input_size
    hidden_size = 32
    output_size = 10
    batch = 2
    seq_len = 8

    params = make_params(k_params, vocab_size, hidden_size, output_size)
    x_ids = jax.random.randint(k_ids, (batch, seq_len), 0, vocab_size, jnp.int32)

    out = jax.block_until_ready(simple_rnn_forward(x_ids, params))
    ref = jax.block_until_ready(reference_forward(x_ids, params))

    assert out.shape == (batch, output_size)
    # bf16 MXU operands (f32 accumulation) -> looser tolerance vs the f32 reference.
    err = float(jnp.max(jnp.abs(out - ref)))
    assert jnp.allclose(out, ref, atol=2e-2, rtol=2e-2), f"mismatch vs reference, max abs err {err}"

    print("KERNEL_OK")
</pallas_src>

<mosaic_0001>
module attributes {stable_mosaic.version = 11 : i64} {
  func.func @_rnn_kernel(%arg0: i32, %arg1: i32, %arg2: memref<8x8x128xbf16, #tpu.memory_space<vmem>>, %arg3: memref<128x128xbf16, #tpu.memory_space<vmem>>, %arg4: memref<128x128xbf16, #tpu.memory_space<vmem>>, %arg5: memref<1x128xf32, #tpu.memory_space<vmem>>, %arg6: memref<8x128xf32, #tpu.memory_space<vmem>>, %arg7: memref<8x128xf32, #tpu.memory_space<vmem>>) attributes {dimension_semantics = [#tpu.dimension_semantics<parallel>, #tpu.dimension_semantics<arbitrary>], iteration_bounds = array<i64: 1, 1>, scalar_prefetch = 0 : i64, scratch_operands = 1 : i64, tpu.core_type = #tpu.core_type<tc>, window_params = [{transform_indices = @transform_0, window_bounds = array<i64: 8, 8, 128>}, {pipeline_mode = #tpu.pipeline_mode<synchronous>, transform_indices = @transform_1, window_bounds = array<i64: 128, 128>}, {pipeline_mode = #tpu.pipeline_mode<synchronous>, transform_indices = @transform_2, window_bounds = array<i64: 128, 128>}, {pipeline_mode = #tpu.pipeline_mode<synchronous>, transform_indices = @transform_3, window_bounds = array<i64: 1, 128>}, {transform_indices = @transform_4, window_bounds = array<i64: 8, 128>}]} {
    %c0_i32 = arith.constant 0 : i32
    %0 = arith.cmpi eq, %arg1, %c0_i32 : i32
    %1 = arith.extui %0 : i1 to i32
    %c0_i32_0 = arith.constant 0 : i32
    %2 = arith.cmpi ne, %1, %c0_i32_0 : i32
    scf.if %2 {
      %cst = arith.constant 0.000000e+00 : f32
      %9 = vector.broadcast %cst : f32 to vector<8x128xf32>
      %c0 = arith.constant 0 : index
      %c0_5 = arith.constant 0 : index
      %10 = vector.load %arg7[%c0, %c0_5] : memref<8x128xf32, #tpu.memory_space<vmem>>, vector<8x128xf32>
      tpu.vector_store %arg7[%c0, %c0_5], %9 {strides = array<i32>} : memref<8x128xf32, #tpu.memory_space<vmem>>, vector<8x128xf32>,
    } else {
    }
    %c0_i32_1 = arith.constant 0 : i32
    %3 = arith.cmpi ne, %arg1, %c0_i32_1 : i32
    %4 = arith.extui %3 : i1 to i32
    %c0_i32_2 = arith.constant 0 : i32
    %5 = arith.cmpi ne, %4, %c0_i32_2 : i32
    scf.if %5 {
      %c0 = arith.constant 0 : index
      %c0_5 = arith.constant 0 : index
      %9 = vector.load %arg7[%c0, %c0_5] : memref<8x128xf32, #tpu.memory_space<vmem>>, vector<8x128xf32>
      %c0_i32_6 = arith.constant 0 : i32
      %10 = arith.index_cast %c0_i32_6 : i32 to index
      %c0_7 = arith.constant 0 : index
      %c0_8 = arith.constant 0 : index
      %11 = vector.load %arg2[%10, %c0_7, %c0_8] : memref<8x8x128xbf16, #tpu.memory_space<vmem>>, vector<1x8x128xbf16>
      %12 = vector.shape_cast %11 : vector<1x8x128xbf16> to vector<8x128xbf16>
      %13 = arith.extf %12 : vector<8x128xbf16> to vector<8x128xf32>
      %14 = arith.truncf %9 : vector<8x128xf32> to vector<8x128xbf16>
      %c0_9 = arith.constant 0 : index
      %c0_10 = arith.constant 0 : index
      %15 = vector.load %arg3[%c0_9, %c0_10] : memref<128x128xbf16, #tpu.memory_space<vmem>>, vector<128x128xbf16>
      %cst = arith.constant dense<0.000000e+00> : vector<8x128xf32>
      %16 = tpu.matmul %14, %15, %cst {dimension_numbers = #tpu.dot_dimension_numbers<[1], [0], [0], [1], [0, 0, 1, 1], [], []>} : vector<8x128xbf16>, vector<128x128xbf16>, vector<8x128xf32> -> vector<8x128xf32>
      %17 = arith.addf %13, %16 : vector<8x128xf32>
      %18 = math.tanh %17 : vector<8x128xf32>
      %c1_i32 = arith.constant 1 : i32
      %19 = arith.index_cast %c1_i32 : i32 to index
      %c0_11 = arith.constant 0 : index
      %c0_12 = arith.constant 0 : index
      %20 = vector.load %arg2[%19, %c0_11, %c0_12] : memref<8x8x128xbf16, #tpu.memory_space<vmem>>, vector<1x8x128xbf16>
      %21 = vector.shape_cast %20 : vector<1x8x128xbf16> to vector<8x128xbf16>
      %22 = arith.extf %21 : vector<8x128xbf16> to vector<8x128xf32>
      %23 = arith.truncf %18 : vector<8x128xf32> to vector<8x128xbf16>
      %c0_13 = arith.constant 0 : index
      %c0_14 = arith.constant 0 : index
      %24 = vector.load %arg3[%c0_13, %c0_14] : memref<128x128xbf16, #tpu.memory_space<vmem>>, vector<128x128xbf16>
      %cst_15 = arith.constant dense<0.000000e+00> : vector<8x128xf32>
      %25 = tpu.matmul %23, %24, %cst_15 {dimension_numbers = #tpu.dot_dimension_numbers<[1], [0], [0], [1], [0, 0, 1, 1], [], []>} : vector<8x128xbf16>, vector<128x128xbf16>, vector<8x128xf32> -> vector<8x128xf32>
      %26 = arith.addf %22, %25 : vector<8x128xf32>
      %27 = math.tanh %26 : vector<8x128xf32>
      %c2_i32 = arith.constant 2 : i32
      %28 = arith.index_cast %c2_i32 : i32 to index
      %c0_16 = arith.constant 0 : index
      %c0_17 = arith.constant 0 : index
      %29 = vector.load %arg2[%28, %c0_16, %c0_17] : memref<8x8x128xbf16, #tpu.memory_space<vmem>>, vector<1x8x128xbf16>
      %30 = vector.shape_cast %29 : vector<1x8x128xbf16> to vector<8x128xbf16>
      %31 = arith.extf %30 : vector<8x128xbf16> to vector<8x128xf32>
      %32 = arith.truncf %27 : vector<8x128xf32> to vector<8x128xbf16>
      %c0_18 = arith.constant 0 : index
      %c0_19 = arith.constant 0 : index
      %33 = vector.load %arg3[%c0_18, %c0_19] : memref<128x128xbf16, #tpu.memory_space<vmem>>, vector<128x128xbf16>
      %cst_20 = arith.constant dense<0.000000e+00> : vector<8x128xf32>
      %34 = tpu.matmul %32, %33, %cst_20 {dimension_numbers = #tpu.dot_dimension_numbers<[1], [0], [0], [1], [0, 0, 1, 1], [], []>} : vector<8x128xbf16>, vector<128x128xbf16>, vector<8x128xf32> -> vector<8x128xf32>
      %35 = arith.addf %31, %34 : vector<8x128xf32>
      %36 = math.tanh %35 : vector<8x128xf32>
      %c3_i32 = arith.constant 3 : i32
      %37 = arith.index_cast %c3_i32 : i32 to index
      %c0_21 = arith.constant 0 : index
      %c0_22 = arith.constant 0 : index
      %38 = vector.load %arg2[%37, %c0_21, %c0_22] : memref<8x8x128xbf16, #tpu.memory_space<vmem>>, vector<1x8x128xbf16>
      %39 = vector.shape_cast %38 : vector<1x8x128xbf16> to vector<8x128xbf16>
      %40 = arith.extf %39 : vector<8x128xbf16> to vector<8x128xf32>
      %41 = arith.truncf %36 : vector<8x128xf32> to vector<8x128xbf16>
      %c0_23 = arith.constant 0 : index
      %c0_24 = arith.constant 0 : index
      %42 = vector.load %arg3[%c0_23, %c0_24] : memref<128x128xbf16, #tpu.memory_space<vmem>>, vector<128x128xbf16>
      %cst_25 = arith.constant dense<0.000000e+00> : vector<8x128xf32>
      %43 = tpu.matmul %41, %42, %cst_25 {dimension_numbers = #tpu.dot_dimension_numbers<[1], [0], [0], [1], [0, 0, 1, 1], [], []>} : vector<8x128xbf16>, vector<128x128xbf16>, vector<8x128xf32> -> vector<8x128xf32>
      %44 = arith.addf %40, %43 : vector<8x128xf32>
      %45 = math.tanh %44 : vector<8x128xf32>
      %c4_i32 = arith.constant 4 : i32
      %46 = arith.index_cast %c4_i32 : i32 to index
      %c0_26 = arith.constant 0 : index
      %c0_27 = arith.constant 0 : index
      %47 = vector.load %arg2[%46, %c0_26, %c0_27] : memref<8x8x128xbf16, #tpu.memory_space<vmem>>, vector<1x8x128xbf16>
      %48 = vector.shape_cast %47 : vector<1x8x128xbf16> to vector<8x128xbf16>
      %49 = arith.extf %48 : vector<8x128xbf16> to vector<8x128xf32>
      %50 = arith.truncf %45 : vector<8x128xf32> to vector<8x128xbf16>
      %c0_28 = arith.constant 0 : index
      %c0_29 = arith.constant 0 : index
      %51 = vector.load %arg3[%c0_28, %c0_29] : memref<128x128xbf16, #tpu.memory_space<vmem>>, vector<128x128xbf16>
      %cst_30 = arith.constant dense<0.000000e+00> : vector<8x128xf32>
      %52 = tpu.matmul %50, %51, %cst_30 {dimension_numbers = #tpu.dot_dimension_numbers<[1], [0], [0], [1], [0, 0, 1, 1], [], []>} : vector<8x128xbf16>, vector<128x128xbf16>, vector<8x128xf32> -> vector<8x128xf32>
      %53 = arith.addf %49, %52 : vector<8x128xf32>
      %54 = math.tanh %53 : vector<8x128xf32>
      %c5_i32 = arith.constant 5 : i32
      %55 = arith.index_cast %c5_i32 : i32 to index
      %c0_31 = arith.constant 0 : index
      %c0_32 = arith.constant 0 : index
      %56 = vector.load %arg2[%55, %c0_31, %c0_32] : memref<8x8x128xbf16, #tpu.memory_space<vmem>>, vector<1x8x128xbf16>
      %57 = vector.shape_cast %56 : vector<1x8x128xbf16> to vector<8x128xbf16>
      %58 = arith.extf %57 : vector<8x128xbf16> to vector<8x128xf32>
      %59 = arith.truncf %54 : vector<8x128xf32> to vector<8x128xbf16>
      %c0_33 = arith.constant 0 : index
      %c0_34 = arith.constant 0 : index
      %60 = vector.load %arg3[%c0_33, %c0_34] : memref<128x128xbf16, #tpu.memory_space<vmem>>, vector<128x128xbf16>
      %cst_35 = arith.constant dense<0.000000e+00> : vector<8x128xf32>
      %61 = tpu.matmul %59, %60, %cst_35 {dimension_numbers = #tpu.dot_dimension_numbers<[1], [0], [0], [1], [0, 0, 1, 1], [], []>} : vector<8x128xbf16>, vector<128x128xbf16>, vector<8x128xf32> -> vector<8x128xf32>
      %62 = arith.addf %58, %61 : vector<8x128xf32>
      %63 = math.tanh %62 : vector<8x128xf32>
      %c6_i32 = arith.constant 6 : i32
      %64 = arith.index_cast %c6_i32 : i32 to index
      %c0_36 = arith.constant 0 : index
      %c0_37 = arith.constant 0 : index
      %65 = vector.load %arg2[%64, %c0_36, %c0_37] : memref<8x8x128xbf16, #tpu.memory_space<vmem>>, vector<1x8x128xbf16>
      %66 = vector.shape_cast %65 : vector<1x8x128xbf16> to vector<8x128xbf16>
      %67 = arith.extf %66 : vector<8x128xbf16> to vector<8x128xf32>
      %68 = arith.truncf %63 : vector<8x128xf32> to vector<8x128xbf16>
      %c0_38 = arith.constant 0 : index
      %c0_39 = arith.constant 0 : index
      %69 = vector.load %arg3[%c0_38, %c0_39] : memref<128x128xbf16, #tpu.memory_space<vmem>>, vector<128x128xbf16>
      %cst_40 = arith.constant dense<0.000000e+00> : vector<8x128xf32>
      %70 = tpu.matmul %68, %69, %cst_40 {dimension_numbers = #tpu.dot_dimension_numbers<[1], [0], [0], [1], [0, 0, 1, 1], [], []>} : vector<8x128xbf16>, vector<128x128xbf16>, vector<8x128xf32> -> vector<8x128xf32>
      %71 = arith.addf %67, %70 : vector<8x128xf32>
      %72 = math.tanh %71 : vector<8x128xf32>
      %c7_i32 = arith.constant 7 : i32
      %73 = arith.index_cast %c7_i32 : i32 to index
      %c0_41 = arith.constant 0 : index
      %c0_42 = arith.constant 0 : index
      %74 = vector.load %arg2[%73, %c0_41, %c0_42] : memref<8x8x128xbf16, #tpu.memory_space<vmem>>, vector<1x8x128xbf16>
      %75 = vector.shape_cast %74 : vector<1x8x128xbf16> to vector<8x128xbf16>
      %76 = arith.extf %75 : vector<8x128xbf16> to vector<8x128xf32>
      %77 = arith.truncf %72 : vector<8x128xf32> to vector<8x128xbf16>
      %c0_43 = arith.constant 0 : index
      %c0_44 = arith.constant 0 : index
      %78 = vector.load %arg3[%c0_43, %c0_44] : memref<128x128xbf16, #tpu.memory_space<vmem>>, vector<128x128xbf16>
      %cst_45 = arith.constant dense<0.000000e+00> : vector<8x128xf32>
      %79 = tpu.matmul %77, %78, %cst_45 {dimension_numbers = #tpu.dot_dimension_numbers<[1], [0], [0], [1], [0, 0, 1, 1], [], []>} : vector<8x128xbf16>, vector<128x128xbf16>, vector<8x128xf32> -> vector<8x128xf32>
      %80 = arith.addf %76, %79 : vector<8x128xf32>
      %81 = math.tanh %80 : vector<8x128xf32>
      %c8_i32 = arith.constant 8 : i32
      %c0_46 = arith.constant 0 : index
      %c0_47 = arith.constant 0 : index
      %82 = vector.load %arg7[%c0_46, %c0_47] : memref<8x128xf32, #tpu.memory_space<vmem>>, vector<8x128xf32>
      tpu.vector_store %arg7[%c0_46, %c0_47], %81 {strides = array<i32>} : memref<8x128xf32, #tpu.memory_space<vmem>>, vector<8x128xf32>,
    } else {
    }
    %c0_i32_3 = arith.constant 0 : i32
    %6 = arith.cmpi eq, %arg1, %c0_i32_3 : i32
    %7 = arith.extui %6 : i1 to i32
    %c0_i32_4 = arith.constant 0 : i32
    %8 = arith.cmpi ne, %7, %c0_i32_4 : i32
    scf.if %8 {
      %c0 = arith.constant 0 : index
      %c0_5 = arith.constant 0 : index
      %9 = vector.load %arg7[%c0, %c0_5] : memref<8x128xf32, #tpu.memory_space<vmem>>, vector<8x128xf32>
      %c0_i32_6 = arith.constant 0 : i32
      %10 = arith.index_cast %c0_i32_6 : i32 to index
      %c0_7 = arith.constant 0 : index
      %c0_8 = arith.constant 0 : index
      %11 = vector.load %arg2[%10, %c0_7, %c0_8] : memref<8x8x128xbf16, #tpu.memory_space<vmem>>, vector<1x8x128xbf16>
      %12 = vector.shape_cast %11 : vector<1x8x128xbf16> to vector<8x128xbf16>
      %13 = arith.extf %12 : vector<8x128xbf16> to vector<8x128xf32>
      %14 = arith.truncf %9 : vector<8x128xf32> to vector<8x128xbf16>
      %c0_9 = arith.constant 0 : index
      %c0_10 = arith.constant 0 : index
      %15 = vector.load %arg3[%c0_9, %c0_10] : memref<128x128xbf16, #tpu.memory_space<vmem>>, vector<128x128xbf16>
      %cst = arith.constant dense<0.000000e+00> : vector<8x128xf32>
      %16 = tpu.matmul %14, %15, %cst {dimension_numbers = #tpu.dot_dimension_numbers<[1], [0], [0], [1], [0, 0, 1, 1], [], []>} : vector<8x128xbf16>, vector<128x128xbf16>, vector<8x128xf32> -> vector<8x128xf32>
      %17 = arith.addf %13, %16 : vector<8x128xf32>
      %18 = math.tanh %17 : vector<8x128xf32>
      %c1_i32 = arith.constant 1 : i32
      %19 = arith.index_cast %c1_i32 : i32 to index
      %c0_11 = arith.constant 0 : index
      %c0_12 = arith.constant 0 : index
      %20 = vector.load %arg2[%19, %c0_11, %c0_12] : memref<8x8x128xbf16, #tpu.memory_space<vmem>>, vector<1x8x128xbf16>
      %21 = vector.shape_cast %20 : vector<1x8x128xbf16> to vector<8x128xbf16>
      %22 = arith.extf %21 : vector<8x128xbf16> to vector<8x128xf32>
      %23 = arith.truncf %18 : vector<8x128xf32> to vector<8x128xbf16>
      %c0_13 = arith.constant 0 : index
      %c0_14 = arith.constant 0 : index
      %24 = vector.load %arg3[%c0_13, %c0_14] : memref<128x128xbf16, #tpu.memory_space<vmem>>, vector<128x128xbf16>
      %cst_15 = arith.constant dense<0.000000e+00> : vector<8x128xf32>
      %25 = tpu.matmul %23, %24, %cst_15 {dimension_numbers = #tpu.dot_dimension_numbers<[1], [0], [0], [1], [0, 0, 1, 1], [], []>} : vector<8x128xbf16>, vector<128x128xbf16>, vector<8x128xf32> -> vector<8x128xf32>
      %26 = arith.addf %22, %25 : vector<8x128xf32>
      %27 = math.tanh %26 : vector<8x128xf32>
      %c2_i32 = arith.constant 2 : i32
      %28 = arith.index_cast %c2_i32 : i32 to index
      %c0_16 = arith.constant 0 : index
      %c0_17 = arith.constant 0 : index
      %29 = vector.load %arg2[%28, %c0_16, %c0_17] : memref<8x8x128xbf16, #tpu.memory_space<vmem>>, vector<1x8x128xbf16>
      %30 = vector.shape_cast %29 : vector<1x8x128xbf16> to vector<8x128xbf16>
      %31 = arith.extf %30 : vector<8x128xbf16> to vector<8x128xf32>
      %32 = arith.truncf %27 : vector<8x128xf32> to vector<8x128xbf16>
      %c0_18 = arith.constant 0 : index
      %c0_19 = arith.constant 0 : index
      %33 = vector.load %arg3[%c0_18, %c0_19] : memref<128x128xbf16, #tpu.memory_space<vmem>>, vector<128x128xbf16>
      %cst_20 = arith.constant dense<0.000000e+00> : vector<8x128xf32>
      %34 = tpu.matmul %32, %33, %cst_20 {dimension_numbers = #tpu.dot_dimension_numbers<[1], [0], [0], [1], [0, 0, 1, 1], [], []>} : vector<8x128xbf16>, vector<128x128xbf16>, vector<8x128xf32> -> vector<8x128xf32>
      %35 = arith.addf %31, %34 : vector<8x128xf32>
      %36 = math.tanh %35 : vector<8x128xf32>
      %c3_i32 = arith.constant 3 : i32
      %37 = arith.index_cast %c3_i32 : i32 to index
      %c0_21 = arith.constant 0 : index
      %c0_22 = arith.constant 0 : index
      %38 = vector.load %arg2[%37, %c0_21, %c0_22] : memref<8x8x128xbf16, #tpu.memory_space<vmem>>, vector<1x8x128xbf16>
      %39 = vector.shape_cast %38 : vector<1x8x128xbf16> to vector<8x128xbf16>
      %40 = arith.extf %39 : vector<8x128xbf16> to vector<8x128xf32>
      %41 = arith.truncf %36 : vector<8x128xf32> to vector<8x128xbf16>
      %c0_23 = arith.constant 0 : index
      %c0_24 = arith.constant 0 : index
      %42 = vector.load %arg3[%c0_23, %c0_24] : memref<128x128xbf16, #tpu.memory_space<vmem>>, vector<128x128xbf16>
      %cst_25 = arith.constant dense<0.000000e+00> : vector<8x128xf32>
      %43 = tpu.matmul %41, %42, %cst_25 {dimension_numbers = #tpu.dot_dimension_numbers<[1], [0], [0], [1], [0, 0, 1, 1], [], []>} : vector<8x128xbf16>, vector<128x128xbf16>, vector<8x128xf32> -> vector<8x128xf32>
      %44 = arith.addf %40, %43 : vector<8x128xf32>
      %45 = math.tanh %44 : vector<8x128xf32>
      %c4_i32 = arith.constant 4 : i32
      %46 = arith.index_cast %c4_i32 : i32 to index
      %c0_26 = arith.constant 0 : index
      %c0_27 = arith.constant 0 : index
      %47 = vector.load %arg2[%46, %c0_26, %c0_27] : memref<8x8x128xbf16, #tpu.memory_space<vmem>>, vector<1x8x128xbf16>
      %48 = vector.shape_cast %47 : vector<1x8x128xbf16> to vector<8x128xbf16>
      %49 = arith.extf %48 : vector<8x128xbf16> to vector<8x128xf32>
      %50 = arith.truncf %45 : vector<8x128xf32> to vector<8x128xbf16>
      %c0_28 = arith.constant 0 : index
      %c0_29 = arith.constant 0 : index
      %51 = vector.load %arg3[%c0_28, %c0_29] : memref<128x128xbf16, #tpu.memory_space<vmem>>, vector<128x128xbf16>
      %cst_30 = arith.constant dense<0.000000e+00> : vector<8x128xf32>
      %52 = tpu.matmul %50, %51, %cst_30 {dimension_numbers = #tpu.dot_dimension_numbers<[1], [0], [0], [1], [0, 0, 1, 1], [], []>} : vector<8x128xbf16>, vector<128x128xbf16>, vector<8x128xf32> -> vector<8x128xf32>
      %53 = arith.addf %49, %52 : vector<8x128xf32>
      %54 = math.tanh %53 : vector<8x128xf32>
      %c5_i32 = arith.constant 5 : i32
      %55 = arith.index_cast %c5_i32 : i32 to index
      %c0_31 = arith.constant 0 : index
      %c0_32 = arith.constant 0 : index
      %56 = vector.load %arg2[%55, %c0_31, %c0_32] : memref<8x8x128xbf16, #tpu.memory_space<vmem>>, vector<1x8x128xbf16>
      %57 = vector.shape_cast %56 : vector<1x8x128xbf16> to vector<8x128xbf16>
      %58 = arith.extf %57 : vector<8x128xbf16> to vector<8x128xf32>
      %59 = arith.truncf %54 : vector<8x128xf32> to vector<8x128xbf16>
      %c0_33 = arith.constant 0 : index
      %c0_34 = arith.constant 0 : index
      %60 = vector.load %arg3[%c0_33, %c0_34] : memref<128x128xbf16, #tpu.memory_space<vmem>>, vector<128x128xbf16>
      %cst_35 = arith.constant dense<0.000000e+00> : vector<8x128xf32>
      %61 = tpu.matmul %59, %60, %cst_35 {dimension_numbers = #tpu.dot_dimension_numbers<[1], [0], [0], [1], [0, 0, 1, 1], [], []>} : vector<8x128xbf16>, vector<128x128xbf16>, vector<8x128xf32> -> vector<8x128xf32>
      %62 = arith.addf %58, %61 : vector<8x128xf32>
      %63 = math.tanh %62 : vector<8x128xf32>
      %c6_i32 = arith.constant 6 : i32
      %64 = arith.index_cast %c6_i32 : i32 to index
      %c0_36 = arith.constant 0 : index
      %c0_37 = arith.constant 0 : index
      %65 = vector.load %arg2[%64, %c0_36, %c0_37] : memref<8x8x128xbf16, #tpu.memory_space<vmem>>, vector<1x8x128xbf16>
      %66 = vector.shape_cast %65 : vector<1x8x128xbf16> to vector<8x128xbf16>
      %67 = arith.extf %66 : vector<8x128xbf16> to vector<8x128xf32>
      %68 = arith.truncf %63 : vector<8x128xf32> to vector<8x128xbf16>
      %c0_38 = arith.constant 0 : index
      %c0_39 = arith.constant 0 : index
      %69 = vector.load %arg3[%c0_38, %c0_39] : memref<128x128xbf16, #tpu.memory_space<vmem>>, vector<128x128xbf16>
      %cst_40 = arith.constant dense<0.000000e+00> : vector<8x128xf32>
      %70 = tpu.matmul %68, %69, %cst_40 {dimension_numbers = #tpu.dot_dimension_numbers<[1], [0], [0], [1], [0, 0, 1, 1], [], []>} : vector<8x128xbf16>, vector<128x128xbf16>, vector<8x128xf32> -> vector<8x128xf32>
      %71 = arith.addf %67, %70 : vector<8x128xf32>
      %72 = math.tanh %71 : vector<8x128xf32>
      %c7_i32 = arith.constant 7 : i32
      %73 = arith.index_cast %c7_i32 : i32 to index
      %c0_41 = arith.constant 0 : index
      %c0_42 = arith.constant 0 : index
      %74 = vector.load %arg2[%73, %c0_41, %c0_42] : memref<8x8x128xbf16, #tpu.memory_space<vmem>>, vector<1x8x128xbf16>
      %75 = vector.shape_cast %74 : vector<1x8x128xbf16> to vector<8x128xbf16>
      %76 = arith.extf %75 : vector<8x128xbf16> to vector<8x128xf32>
      %77 = arith.truncf %72 : vector<8x128xf32> to vector<8x128xbf16>
      %c0_43 = arith.constant 0 : index
      %c0_44 = arith.constant 0 : index
      %78 = vector.load %arg3[%c0_43, %c0_44] : memref<128x128xbf16, #tpu.memory_space<vmem>>, vector<128x128xbf16>
      %cst_45 = arith.constant dense<0.000000e+00> : vector<8x128xf32>
      %79 = tpu.matmul %77, %78, %cst_45 {dimension_numbers = #tpu.dot_dimension_numbers<[1], [0], [0], [1], [0, 0, 1, 1], [], []>} : vector<8x128xbf16>, vector<128x128xbf16>, vector<8x128xf32> -> vector<8x128xf32>
      %80 = arith.addf %76, %79 : vector<8x128xf32>
      %81 = math.tanh %80 : vector<8x128xf32>
      %c8_i32 = arith.constant 8 : i32
      %c0_46 = arith.constant 0 : index
      %c0_47 = arith.constant 0 : index
      %82 = vector.load %arg7[%c0_46, %c0_47] : memref<8x128xf32, #tpu.memory_space<vmem>>, vector<8x128xf32>
      tpu.vector_store %arg7[%c0_46, %c0_47], %81 {strides = array<i32>} : memref<8x128xf32, #tpu.memory_space<vmem>>, vector<8x128xf32>,
      %83 = arith.truncf %81 : vector<8x128xf32> to vector<8x128xbf16>
      %c0_48 = arith.constant 0 : index
      %c0_49 = arith.constant 0 : index
      %84 = vector.load %arg4[%c0_48, %c0_49] : memref<128x128xbf16, #tpu.memory_space<vmem>>, vector<128x128xbf16>
      %cst_50 = arith.constant dense<0.000000e+00> : vector<8x128xf32>
      %85 = tpu.matmul %83, %84, %cst_50 {dimension_numbers = #tpu.dot_dimension_numbers<[1], [0], [0], [1], [0, 0, 1, 1], [], []>} : vector<8x128xbf16>, vector<128x128xbf16>, vector<8x128xf32> -> vector<8x128xf32>
      %c0_51 = arith.constant 0 : index
      %c0_52 = arith.constant 0 : index
      %86 = vector.load %arg5[%c0_51, %c0_52] : memref<1x128xf32, #tpu.memory_space<vmem>>, vector<1x128xf32>
      %87 = vector.broadcast %86 : vector<1x128xf32> to vector<8x128xf32>
      %88 = arith.addf %85, %87 : vector<8x128xf32>
      %c0_53 = arith.constant 0 : index
      %c0_54 = arith.constant 0 : index
      %89 = vector.load %arg6[%c0_53, %c0_54] : memref<8x128xf32, #tpu.memory_space<vmem>>, vector<8x128xf32>
      tpu.vector_store %arg6[%c0_53, %c0_54], %88 {strides = array<i32>} : memref<8x128xf32, #tpu.memory_space<vmem>>, vector<8x128xf32>,
    } else {
    }
    return
  }
  func.func @transform_0(%arg0: i32, %arg1: i32) -> (i32, i32, i32) {
    %c0_i32 = arith.constant 0 : i32
    %c0_i32_0 = arith.constant 0 : i32
    return %arg1, %arg0, %c0_i32 : i32, i32, i32
  }
  func.func @transform_1(%arg0: i32, %arg1: i32) -> (i32, i32) {
    %c0_i32 = arith.constant 0 : i32
    %c0_i32_0 = arith.constant 0 : i32
    %c0_i32_1 = arith.constant 0 : i32
    return %c0_i32, %c0_i32_0 : i32, i32
  }
  func.func @transform_2(%arg0: i32, %arg1: i32) -> (i32, i32) {
    %c0_i32 = arith.constant 0 : i32
    %c0_i32_0 = arith.constant 0 : i32
    %c0_i32_1 = arith.constant 0 : i32
    return %c0_i32, %c0_i32_0 : i32, i32
  }
  func.func @transform_3(%arg0: i32, %arg1: i32) -> (i32, i32) {
    %c0_i32 = arith.constant 0 : i32
    %c0_i32_0 = arith.constant 0 : i32
    %c0_i32_1 = arith.constant 0 : i32
    return %c0_i32, %c0_i32_0 : i32, i32
  }
  func.func @transform_4(%arg0: i32, %arg1: i32) -> (i32, i32) {
    %c0_i32 = arith.constant 0 : i32
    %c0_i32_0 = arith.constant 0 : i32
    return %arg0, %c0_i32 : i32, i32
  }
}

</mosaic_0001>

<llo_original>
// kernel: tpu_custom_call.1
$region0: #{tpu_custom_call.1}
  #allocation0 [shape = 'u32[]', space=smem, size = 0x4, offset = 0x4, fixed_abs, tag = 'smem constant byte address 0x4 - core index']
  #allocation1 [shape = 'u32[144,128]{1,0:T(1,128)}', space=vmem, size = 0x12000, scoped, tag = 'internal scratch']
  #allocation2 [shape = 'f32[8,128]{1,0:T(8,128)}', space=vmem, size = 0x1000, scoped, tag = 'scratch operand']
  %s0 = inlined_call_operand.hbm [shape: bf16[8,8,128], index: 0, kind: input, shape index: {}]
  %s1 = inlined_call_operand.hbm [shape: bf16[128,128], index: 1, kind: input, shape index: {}]
  %s2 = inlined_call_operand.hbm [shape: bf16[128,128], index: 2, kind: input, shape index: {}]
  %s3 = inlined_call_operand.vmem [shape: f32[1,128], index: 3, kind: input, shape index: {}]
  %s4 = inlined_call_operand.hbm [shape: f32[8,128], index: 4, kind: output, shape index: {}]
  %s5 = sld [smem:[#allocation0]]
  $region50: #{tpu_custom_call.1} parent=0
    _
  %s7 = ssub.s32 1, %s5
  %s8 = scalar_select 0, %s7, %s5
  $region1: #{tpu_custom_call.1} parent=0
    #allocation3 [shape = 'u8[16384]{0}', space=vmem, size = 0x4000, scoped, tag = 'input window, operand 0, single buffered']
    #allocation4 [shape = 's32[1]{0}', space=sflag, size = 0x4, scoped, tag = 'scoped memory for tpu_custom_call.1']
    #allocation5 [shape = 's32[1]{0}', space=sflag, size = 0x4, scoped, tag = 'scoped memory for tpu_custom_call.1']
    #allocation6 [shape = 'u8[32768]{0}', space=vmem, size = 0x8000, scoped, tag = 'input window, operand 1, single buffered']
    #allocation7 [shape = 's32[1]{0}', space=sflag, size = 0x4, scoped, tag = 'scoped memory for tpu_custom_call.1']
    #allocation8 [shape = 'u8[32768]{0}', space=vmem, size = 0x8000, scoped, tag = 'input window, operand 2, single buffered']
    #allocation9 [shape = 'u8[4096]{0}', space=vmem, size = 0x1000, scoped, tag = 'output window, operand 0, single buffered']
    %9 = vsyncpa [#allocation4], 0
    %10 = vsyncpa [#allocation7], 0
    %11 = vsyncpa [#allocation5], 0
    // Predicated region
    $region2: #{tpu_custom_call.1} parent=1 // pred_check
      _
    $region3: #{tpu_custom_call.1} parent=1 // pred_check_branch
      %13 = sbr.rel (0) target = $region5
    $region4: #{tpu_custom_call.1} parent=1 // pred_region
      %s15 = ssub.s32 512, 512
      %16 = vsyncadd [#allocation4], %s15
      %s17 = sshll.u32 [#allocation3], 4
      %s18 = int_to_ptr.vmem [resolvable:$true] %s17
      %23 = dma.hbm_to_vmem [thread:$0]  %s0, 512, %s18, [#allocation4], 64, 64, 4
    $region5: #{tpu_custom_call.1} parent=1 // pred_fallthru
      _
    // Predicated region
    $region6: #{tpu_custom_call.1} parent=1 // pred_check
      _
    $region7: #{tpu_custom_call.1} parent=1 // pred_check_branch
      %25 = sbr.rel (0) target = $region9
    $region8: #{tpu_custom_call.1} parent=1 // pred_region
      %s27 = ssub.s32 1024, 1024
      %28 = vsyncadd [#allocation7], %s27
      %s29 = sshll.u32 [#allocation6], 4
      %s30 = int_to_ptr.vmem [resolvable:$true] %s29
      %35 = dma.hbm_to_vmem [thread:$0]  %s1, 1024, %s30, [#allocation7], 64, 64, 4
    $region9: #{tpu_custom_call.1} parent=1 // pred_fallthru
      _
    // Predicated region
    $region10: #{tpu_custom_call.1} parent=1 // pred_check
      _
    $region11: #{tpu_custom_call.1} parent=1 // pred_check_branch
      %37 = sbr.rel (0) target = $region13
    $region12: #{tpu_custom_call.1} parent=1 // pred_region
      %s39 = ssub.s32 1024, 1024
      %40 = vsyncadd [#allocation7], %s39
      %s41 = sshll.u32 [#allocation8], 4
      %s42 = int_to_ptr.vmem [resolvable:$true] %s41
      %47 = dma.hbm_to_vmem [thread:$0]  %s2, 1024, %s42, [#allocation7], 64, 64, 4
    $region13: #{tpu_custom_call.1} parent=1 // pred_fallthru
      _
    // Predicated region
    $region14: #{tpu_custom_call.1} parent=1 // pred_check
      _
    $region15: #{tpu_custom_call.1} parent=1 // pred_check_branch
      %49 = sbr.rel (0) target = $region17
    $region16: #{tpu_custom_call.1} parent=1 // pred_region
      _
    $region17: #{tpu_custom_call.1} parent=1 // pred_fallthru
      _
    // Predicated region
    $region18: #{tpu_custom_call.1} parent=1 // pred_check
      _
    $region19: #{tpu_custom_call.1} parent=1 // pred_check_branch
      %51 = sbr.rel (0) target = $region21
    $region20: #{tpu_custom_call.1} parent=1 // pred_region
      %52 = dma.done [#allocation4], 512
    $region21: #{tpu_custom_call.1} parent=1 // pred_fallthru
      _
    // Predicated region
    $region22: #{tpu_custom_call.1} parent=1 // pred_check
      _
    $region23: #{tpu_custom_call.1} parent=1 // pred_check_branch
      %54 = sbr.rel (0) target = $region25
    $region24: #{tpu_custom_call.1} parent=1 // pred_region
      %55 = dma.done [#allocation7], 1024
    $region25: #{tpu_custom_call.1} parent=1 // pred_fallthru
      _
    // Predicated region
    $region26: #{tpu_custom_call.1} parent=1 // pred_check
      _
    $region27: #{tpu_custom_call.1} parent=1 // pred_check_branch
      %57 = sbr.rel (0) target = $region29
    $region28: #{tpu_custom_call.1} parent=1 // pred_region
      %58 = dma.done [#allocation7], 1024
    $region29: #{tpu_custom_call.1} parent=1 // pred_fallthru
      _
    %p60 = scmp.eq.s32.totalorder 0, 0
    // Predicated region
    $region30: #{tpu_custom_call.1} parent=1 // pred_check
      %p61 = pneg %p60
    $region31: #{tpu_custom_call.1} parent=1 // pred_check_branch
      %63 = sbr.rel (%p61) target = $region33
    $region32: #{tpu_custom_call.1} parent=1 // pred_region
      %64 = vst [vmem:[#allocation2] sm:$0xff] 0.0
    $region33: #{tpu_custom_call.1} parent=1 // pred_fallthru
      _
    %p65 = scmp.ne.s32.totalorder 0, 0
    // Predicated region
    $region34: #{tpu_custom_call.1} parent=1 // pred_check
      %p66 = pneg %p65
    $region35: #{tpu_custom_call.1} parent=1 // pred_check_branch
      %68 = sbr.rel (%p66) target = $region37
    $region36: #{tpu_custom_call.1} parent=1 // pred_region
      %v69 = vld [vmem:[#allocation2] sm:$0xff]
      %v70 = vld [vmem:[#allocation3] sm:$0xf]
      %v71 = vunpack.c.l.bf16 %v70
      %v72 = vpack.c.bf16 %v69, %v69
      %v73 = vld [vmem:[#allocation6] sm:$0xf]
      %v74 = vld [vmem:[#allocation6 + $0x4] sm:$0xf]
      %v75 = vld [vmem:[#allocation6 + $0x8] sm:$0xf]
      %v76 = vld [vmem:[#allocation6 + $0xc] sm:$0xf]
      %v77 = vld [vmem:[#allocation6 + $0x10] sm:$0xf]
      %v78 = vld [vmem:[#allocation6 + $0x14] sm:$0xf]
      %v79 = vld [vmem:[#allocation6 + $0x18] sm:$0xf]
      %v80 = vld [vmem:[#allocation6 + $0x1c] sm:$0xf]
      %v81 = vld [vmem:[#allocation6 + $0x20] sm:$0xf]
      %v82 = vld [vmem:[#allocation6 + $0x24] sm:$0xf]
      %v83 = vld [vmem:[#allocation6 + $0x28] sm:$0xf]
      %v84 = vld [vmem:[#allocation6 + $0x2c] sm:$0xf]
      %v85 = vld [vmem:[#allocation6 + $0x30] sm:$0xf]
      %v86 = vld [vmem:[#allocation6 + $0x34] sm:$0xf]
      %v87 = vld [vmem:[#allocation6 + $0x38] sm:$0xf]
      %v88 = vld [vmem:[#allocation6 + $0x3c] sm:$0xf]
      %v105 = vunpack.c.l.b16 %v73
      %v106 = vunpack.c.l.b16 %v74
      %v107 = vunpack.c.l.b16 %v75
      %v108 = vunpack.c.l.b16 %v76
      %v109 = vunpack.c.l.b16 %v77
      %v110 = vunpack.c.l.b16 %v78
      %v111 = vunpack.c.l.b16 %v79
      %v112 = vunpack.c.l.b16 %v80
      %v113 = vunpack.c.l.b16 %v81
      %v114 = vunpack.c.l.b16 %v82
      %v115 = vunpack.c.l.b16 %v83
      %v116 = vunpack.c.l.b16 %v84
      %v117 = vunpack.c.l.b16 %v85
      %v118 = vunpack.c.l.b16 %v86
      %v119 = vunpack.c.l.b16 %v87
      %v120 = vunpack.c.l.b16 %v88
      %v121 = vpack.c.b16 %v106, %v105
      %v122 = vpack.c.b16 %v108, %v107
      %v123 = vpack.c.b16 %v110, %v109
      %v124 = vpack.c.b16 %v112, %v111
      %v125 = vpack.c.b16 %v114, %v113
      %v126 = vpack.c.b16 %v116, %v115
      %v127 = vpack.c.b16 %v118, %v117
      %v128 = vpack.c.b16 %v120, %v119
      %137 = vmatprep.subr.bf16.mxu0 0
      %138 = vmatpush1.bf16.msra.mxu0 %v121
      %139 = vmatprep.subr.bf16.mxu0 0
      %140 = vmatpush1.bf16.msra.mxu0 %v122
      %141 = vmatprep.subr.bf16.mxu0 0
      %142 = vmatpush1.bf16.msra.mxu0 %v123
      %143 = vmatprep.subr.bf16.mxu0 0
      %144 = vmatpush1.bf16.msra.mxu0 %v124
      %145 = vmatprep.subr.bf16.mxu0 0
      %146 = vmatpush1.bf16.msra.mxu0 %v125
      %147 = vmatprep.subr.bf16.mxu0 0
      %148 = vmatpush1.bf16.msra.mxu0 %v126
      %149 = vmatprep.subr.bf16.mxu0 0
      %150 = vmatpush1.bf16.msra.mxu0 %v127
      %151 = vmatprep.subr.bf16.mxu0 0
      %152 = vmatpush1.bf16.msra.mxu0 %v128
      %153 = vmatprep.subr.bf16.mxu0 0
      %154 = vmatpush1.bf16.msra.mxu0 0
      %155 = vmatprep.subr.bf16.mxu0 0
      %156 = vmatpush1.bf16.msra.mxu0 0
      %157 = vmatprep.subr.bf16.mxu0 0
      %158 = vmatpush1.bf16.msra.mxu0 0
      %159 = vmatprep.subr.bf16.mxu0 0
      %160 = vmatpush1.bf16.msra.mxu0 0
      %161 = vmatprep.subr.bf16.mxu0 0
      %162 = vmatpush1.bf16.msra.mxu0 0
      %163 = vmatprep.subr.bf16.mxu0 0
      %164 = vmatpush1.bf16.msra.mxu0 0
      %165 = vmatprep.subr.bf16.mxu0 0
      %166 = vmatpush1.bf16.msra.mxu0 0
      %167 = vmatprep.subr.bf16.mxu0 0
      %168 = vmatpush1.bf16.msra.mxu0 0
      %169 = vmatprep.mubr.bf16.mxu0 0
      %170 = vmatmul.mubr.bf16.gmra.mrb[0].mxu0 %v72
      %v171 = vpop.f32.mrb[0].mxu0
      %v172 = vadd.f32 0.0, %v171
      %v173 = vpop.f32.mrb[0].mxu0
      %v174 = vpop.f32.mrb[0].mxu0
      %v175 = vpop.f32.mrb[0].mxu0
      %176 = vdwg.mxu0
      %v177 = vadd.f32 %v71, %v172
      %v178 = vtanh.pop %v177
      %s179 = scalar_lea.vmem [#allocation3], 4
      %v180 = vld [vmem:[%s179] sm:$0xf]
      %v181 = vunpack.c.l.bf16 %v180
      %v182 = vpack.c.bf16 %v178, %v178
      %183 = vmatprep.subr.bf16.mxu0 0
      %184 = vmatpush1.bf16.msra.mxu0 %v121
      %185 = vmatprep.subr.bf16.mxu0 0
      %186 = vmatpush1.bf16.msra.mxu0 %v122
      %187 = vmatprep.subr.bf16.mxu0 0
      %188 = vmatpush1.bf16.msra.mxu0 %v123
      %189 = vmatprep.subr.bf16.mxu0 0
      %190 = vmatpush1.bf16.msra.mxu0 %v124
      %191 = vmatprep.subr.bf16.mxu0 0
      %192 = vmatpush1.bf16.msra.mxu0 %v125
      %193 = vmatprep.subr.bf16.mxu0 0
      %194 = vmatpush1.bf16.msra.mxu0 %v126
      %195 = vmatprep.subr.bf16.mxu0 0
      %196 = vmatpush1.bf16.msra.mxu0 %v127
      %197 = vmatprep.subr.bf16.mxu0 0
      %198 = vmatpush1.bf16.msra.mxu0 %v128
      %199 = vmatprep.subr.bf16.mxu0 0
      %200 = vmatpush1.bf16.msra.mxu0 0
      %201 = vmatprep.subr.bf16.mxu0 0
      %202 = vmatpush1.bf16.msra.mxu0 0
      %203 = vmatprep.subr.bf16.mxu0 0
      %204 = vmatpush1.bf16.msra.mxu0 0
      %205 = vmatprep.subr.bf16.mxu0 0
      %206 = vmatpush1.bf16.msra.mxu0 0
      %207 = vmatprep.subr.bf16.mxu0 0
      %208 = vmatpush1.bf16.msra.mxu0 0
      %209 = vmatprep.subr.bf16.mxu0 0
      %210 = vmatpush1.bf16.msra.mxu0 0
      %211 = vmatprep.subr.bf16.mxu0 0
      %212 = vmatpush1.bf16.msra.mxu0 0
      %213 = vmatprep.subr.bf16.mxu0 0
      %214 = vmatpush1.bf16.msra.mxu0 0
      %215 = vmatprep.mubr.bf16.mxu0 0
      %216 = vmatmul.mubr.bf16.gmra.mrb[0].mxu0 %v182
      %v217 = vpop.f32.mrb[0].mxu0
      %v218 = vadd.f32 0.0, %v217
      %v219 = vpop.f32.mrb[0].mxu0
      %v220 = vpop.f32.mrb[0].mxu0
      %v221 = vpop.f32.mrb[0].mxu0
      %222 = vdwg.mxu0
      %v223 = vadd.f32 %v181, %v218
      %v224 = vtanh.pop %v223
      %s225 = scalar_lea.vmem [#allocation3], 8
      %v226 = vld [vmem:[%s225] sm:$0xf]
      %v227 = vunpack.c.l.bf16 %v226
      %v228 = vpack.c.bf16 %v224, %v224
      %229 = vmatprep.subr.bf16.mxu0 0
      %230 = vmatpush1.bf16.msra.mxu0 %v121
      %231 = vmatprep.subr.bf16.mxu0 0
      %232 = vmatpush1.bf16.msra.mxu0 %v122
      %233 = vmatprep.subr.bf16.mxu0 0
      %234 = vmatpush1.bf16.msra.mxu0 %v123
      %235 = vmatprep.subr.bf16.mxu0 0
      %236 = vmatpush1.bf16.msra.mxu0 %v124
      %237 = vmatprep.subr.bf16.mxu0 0
      %238 = vmatpush1.bf16.msra.mxu0 %v125
      %239 = vmatprep.subr.bf16.mxu0 0
      %240 = vmatpush1.bf16.msra.mxu0 %v126
      %241 = vmatprep.subr.bf16.mxu0 0
      %242 = vmatpush1.bf16.msra.mxu0 %v127
      %243 = vmatprep.subr.bf16.mxu0 0
      %244 = vmatpush1.bf16.msra.mxu0 %v128
      %245 = vmatprep.subr.bf16.mxu0 0
      %246 = vmatpush1.bf16.msra.mxu0 0
      %247 = vmatprep.subr.bf16.mxu0 0
      %248 = vmatpush1.bf16.msra.mxu0 0
      %249 = vmatprep.subr.bf16.mxu0 0
      %250 = vmatpush1.bf16.msra.mxu0 0
      %251 = vmatprep.subr.bf16.mxu0 0
      %252 = vmatpush1.bf16.msra.mxu0 0
      %253 = vmatprep.subr.bf16.mxu0 0
      %254 = vmatpush1.bf16.msra.mxu0 0
      %255 = vmatprep.subr.bf16.mxu0 0
      %256 = vmatpush1.bf16.msra.mxu0 0
      %257 = vmatprep.subr.bf16.mxu0 0
      %258 = vmatpush1.bf16.msra.mxu0 0
      %259 = vmatprep.subr.bf16.mxu0 0
      %260 = vmatpush1.bf16.msra.mxu0 0
      %261 = vmatprep.mubr.bf16.mxu0 0
      %262 = vmatmul.mubr.bf16.gmra.mrb[0].mxu0 %v228
      %v263 = vpop.f32.mrb[0].mxu0
      %v264 = vadd.f32 0.0, %v263
      %v265 = vpop.f32.mrb[0].mxu0
      %v266 = vpop.f32.mrb[0].mxu0
      %v267 = vpop.f32.mrb[0].mxu0
      %268 = vdwg.mxu0
      %v269 = vadd.f32 %v227, %v264
      %v270 = vtanh.pop %v269
      %s271 = scalar_lea.vmem [#allocation3], 12
      %v272 = vld [vmem:[%s271] sm:$0xf]
      %v273 = vunpack.c.l.bf16 %v272
      %v274 = vpack.c.bf16 %v270, %v270
      %275 = vmatprep.subr.bf16.mxu0 0
      %276 = vmatpush1.bf16.msra.mxu0 %v121
      %277 = vmatprep.subr.bf16.mxu0 0
      %278 = vmatpush1.bf16.msra.mxu0 %v122
      %279 = vmatprep.subr.bf16.mxu0 0
      %280 = vmatpush1.bf16.msra.mxu0 %v123
      %281 = vmatprep.subr.bf16.mxu0 0
      %282 = vmatpush1.bf16.msra.mxu0 %v124
      %283 = vmatprep.subr.bf16.mxu0 0
      %284 = vmatpush1.bf16.msra.mxu0 %v125
      %285 = vmatprep.subr.bf16.mxu0 0
      %286 = vmatpush1.bf16.msra.mxu0 %v126
      %287 = vmatprep.subr.bf16.mxu0 0
      %288 = vmatpush1.bf16.msra.mxu0 %v127
      %289 = vmatprep.subr.bf16.mxu0 0
      %290 = vmatpush1.bf16.msra.mxu0 %v128
      %291 = vmatprep.subr.bf16.mxu0 0
      %292 = vmatpush1.bf16.msra.mxu0 0
      %293 = vmatprep.subr.bf16.mxu0 0
      %294 = vmatpush1.bf16.msra.mxu0 0
      %295 = vmatprep.subr.bf16.mxu0 0
      %296 = vmatpush1.bf16.msra.mxu0 0
      %297 = vmatprep.subr.bf16.mxu0 0
      %298 = vmatpush1.bf16.msra.mxu0 0
      %299 = vmatprep.subr.bf16.mxu0 0
      %300 = vmatpush1.bf16.msra.mxu0 0
      %301 = vmatprep.subr.bf16.mxu0 0
      %302 = vmatpush1.bf16.msra.mxu0 0
      %303 = vmatprep.subr.bf16.mxu0 0
      %304 = vmatpush1.bf16.msra.mxu0 0
      %305 = vmatprep.subr.bf16.mxu0 0
      %306 = vmatpush1.bf16.msra.mxu0 0
      %307 = vmatprep.mubr.bf16.mxu0 0
      %308 = vmatmul.mubr.bf16.gmra.mrb[0].mxu0 %v274
      %v309 = vpop.f32.mrb[0].mxu0
      %v310 = vadd.f32 0.0, %v309
      %v311 = vpop.f32.mrb[0].mxu0
      %v312 = vpop.f32.mrb[0].mxu0
      %v313 = vpop.f32.mrb[0].mxu0
      %314 = vdwg.mxu0
      %v315 = vadd.f32 %v273, %v310
      %v316 = vtanh.pop %v315
      %s317 = scalar_lea.vmem [#allocation3], 16
      %v318 = vld [vmem:[%s317] sm:$0xf]
      %v319 = vunpack.c.l.bf16 %v318
      %v320 = vpack.c.bf16 %v316, %v316
      %321 = vmatprep.subr.bf16.mxu0 0
      %322 = vmatpush1.bf16.msra.mxu0 %v121
      %323 = vmatprep.subr.bf16.mxu0 0
      %324 = vmatpush1.bf16.msra.mxu0 %v122
      %325 = vmatprep.subr.bf16.mxu0 0
      %326 = vmatpush1.bf16.msra.mxu0 %v123
      %327 = vmatprep.subr.bf16.mxu0 0
      %328 = vmatpush1.bf16.msra.mxu0 %v124
      %329 = vmatprep.subr.bf16.mxu0 0
      %330 = vmatpush1.bf16.msra.mxu0 %v125
      %331 = vmatprep.subr.bf16.mxu0 0
      %332 = vmatpush1.bf16.msra.mxu0 %v126
      %333 = vmatprep.subr.bf16.mxu0 0
      %334 = vmatpush1.bf16.msra.mxu0 %v127
      %335 = vmatprep.subr.bf16.mxu0 0
      %336 = vmatpush1.bf16.msra.mxu0 %v128
      %337 = vmatprep.subr.bf16.mxu0 0
      %338 = vmatpush1.bf16.msra.mxu0 0
      %339 = vmatprep.subr.bf16.mxu0 0
      %340 = vmatpush1.bf16.msra.mxu0 0
      %341 = vmatprep.subr.bf16.mxu0 0
      %342 = vmatpush1.bf16.msra.mxu0 0
      %343 = vmatprep.subr.bf16.mxu0 0
      %344 = vmatpush1.bf16.msra.mxu0 0
      %345 = vmatprep.subr.bf16.mxu0 0
      %346 = vmatpush1.bf16.msra.mxu0 0
      %347 = vmatprep.subr.bf16.mxu0 0
      %348 = vmatpush1.bf16.msra.mxu0 0
      %349 = vmatprep.subr.bf16.mxu0 0
      %350 = vmatpush1.bf16.msra.mxu0 0
      %351 = vmatprep.subr.bf16.mxu0 0
      %352 = vmatpush1.bf16.msra.mxu0 0
      %353 = vmatprep.mubr.bf16.mxu0 0
      %354 = vmatmul.mubr.bf16.gmra.mrb[0].mxu0 %v320
      %v355 = vpop.f32.mrb[0].mxu0
      %v356 = vadd.f32 0.0, %v355
      %v357 = vpop.f32.mrb[0].mxu0
      %v358 = vpop.f32.mrb[0].mxu0
      %v359 = vpop.f32.mrb[0].mxu0
      %360 = vdwg.mxu0
      %v361 = vadd.f32 %v319, %v356
      %v362 = vtanh.pop %v361
      %s363 = scalar_lea.vmem [#allocation3], 20
      %v364 = vld [vmem:[%s363] sm:$0xf]
      %v365 = vunpack.c.l.bf16 %v364
      %v366 = vpack.c.bf16 %v362, %v362
      %367 = vmatprep.subr.bf16.mxu0 0
      %368 = vmatpush1.bf16.msra.mxu0 %v121
      %369 = vmatprep.subr.bf16.mxu0 0
      %370 = vmatpush1.bf16.msra.mxu0 %v122
      %371 = vmatprep.subr.bf16.mxu0 0
      %372 = vmatpush1.bf16.msra.mxu0 %v123
      %373 = vmatprep.subr.bf16.mxu0 0
      %374 = vmatpush1.bf16.msra.mxu0 %v124
      %375 = vmatprep.subr.bf16.mxu0 0
      %376 = vmatpush1.bf16.msra.mxu0 %v125
      %377 = vmatprep.subr.bf16.mxu0 0
      %378 = vmatpush1.bf16.msra.mxu0 %v126
      %379 = vmatprep.subr.bf16.mxu0 0
      %380 = vmatpush1.bf16.msra.mxu0 %v127
      %381 = vmatprep.subr.bf16.mxu0 0
      %382 = vmatpush1.bf16.msra.mxu0 %v128
      %383 = vmatprep.subr.bf16.mxu0 0
      %384 = vmatpush1.bf16.msra.mxu0 0
      %385 = vmatprep.subr.bf16.mxu0 0
      %386 = vmatpush1.bf16.msra.mxu0 0
      %387 = vmatprep.subr.bf16.mxu0 0
      %388 = vmatpush1.bf16.msra.mxu0 0
      %389 = vmatprep.subr.bf16.mxu0 0
      %390 = vmatpush1.bf16.msra.mxu0 0
      %391 = vmatprep.subr.bf16.mxu0 0
      %392 = vmatpush1.bf16.msra.mxu0 0
      %393 = vmatprep.subr.bf16.mxu0 0
      %394 = vmatpush1.bf16.msra.mxu0 0
      %395 = vmatprep.subr.bf16.mxu0 0
      %396 = vmatpush1.bf16.msra.mxu0 0
      %397 = vmatprep.subr.bf16.mxu0 0
      %398 = vmatpush1.bf16.msra.mxu0 0
      %399 = vmatprep.mubr.bf16.mxu0 0
      %400 = vmatmul.mubr.bf16.gmra.mrb[0].mxu0 %v366
      %v401 = vpop.f32.mrb[0].mxu0
      %v402 = vadd.f32 0.0, %v401
      %v403 = vpop.f32.mrb[0].mxu0
      %v404 = vpop.f32.mrb[0].mxu0
      %v405 = vpop.f32.mrb[0].mxu0
      %406 = vdwg.mxu0
      %v407 = vadd.f32 %v365, %v402
      %v408 = vtanh.pop %v407
      %s409 = scalar_lea.vmem [#allocation3], 24
      %v410 = vld [vmem:[%s409] sm:$0xf]
      %v411 = vunpack.c.l.bf16 %v410
      %v412 = vpack.c.bf16 %v408, %v408
      %413 = vmatprep.subr.bf16.mxu0 0
      %414 = vmatpush1.bf16.msra.mxu0 %v121
      %415 = vmatprep.subr.bf16.mxu0 0
      %416 = vmatpush1.bf16.msra.mxu0 %v122
      %417 = vmatprep.subr.bf16.mxu0 0
      %418 = vmatpush1.bf16.msra.mxu0 %v123
      %419 = vmatprep.subr.bf16.mxu0 0
      %420 = vmatpush1.bf16.msra.mxu0 %v124
      %421 = vmatprep.subr.bf16.mxu0 0
      %422 = vmatpush1.bf16.msra.mxu0 %v125
      %423 = vmatprep.subr.bf16.mxu0 0
      %424 = vmatpush1.bf16.msra.mxu0 %v126
      %425 = vmatprep.subr.bf16.mxu0 0
      %426 = vmatpush1.bf16.msra.mxu0 %v127
      %427 = vmatprep.subr.bf16.mxu0 0
      %428 = vmatpush1.bf16.msra.mxu0 %v128
      %429 = vmatprep.subr.bf16.mxu0 0
      %430 = vmatpush1.bf16.msra.mxu0 0
      %431 = vmatprep.subr.bf16.mxu0 0
      %432 = vmatpush1.bf16.msra.mxu0 0
      %433 = vmatprep.subr.bf16.mxu0 0
      %434 = vmatpush1.bf16.msra.mxu0 0
      %435 = vmatprep.subr.bf16.mxu0 0
      %436 = vmatpush1.bf16.msra.mxu0 0
      %437 = vmatprep.subr.bf16.mxu0 0
      %438 = vmatpush1.bf16.msra.mxu0 0
      %439 = vmatprep.subr.bf16.mxu0 0
      %440 = vmatpush1.bf16.msra.mxu0 0
      %441 = vmatprep.subr.bf16.mxu0 0
      %442 = vmatpush1.bf16.msra.mxu0 0
      %443 = vmatprep.subr.bf16.mxu0 0
      %444 = vmatpush1.bf16.msra.mxu0 0
      %445 = vmatprep.mubr.bf16.mxu0 0
      %446 = vmatmul.mubr.bf16.gmra.mrb[0].mxu0 %v412
      %v447 = vpop.f32.mrb[0].mxu0
      %v448 = vadd.f32 0.0, %v447
      %v449 = vpop.f32.mrb[0].mxu0
      %v450 = vpop.f32.mrb[0].mxu0
      %v451 = vpop.f32.mrb[0].mxu0
      %452 = vdwg.mxu0
      %v453 = vadd.f32 %v411, %v448
      %v454 = vtanh.pop %v453
      %s455 = scalar_lea.vmem [#allocation3], 28
      %v456 = vld [vmem:[%s455] sm:$0xf]
      %v457 = vunpack.c.l.bf16 %v456
      %v458 = vpack.c.bf16 %v454, %v454
      %459 = vmatprep.subr.bf16.mxu0 0
      %460 = vmatpush1.bf16.msra.mxu0 %v121
      %461 = vmatprep.subr.bf16.mxu0 0
      %462 = vmatpush1.bf16.msra.mxu0 %v122
      %463 = vmatprep.subr.bf16.mxu0 0
      %464 = vmatpush1.bf16.msra.mxu0 %v123
      %465 = vmatprep.subr.bf16.mxu0 0
      %466 = vmatpush1.bf16.msra.mxu0 %v124
      %467 = vmatprep.subr.bf16.mxu0 0
      %468 = vmatpush1.bf16.msra.mxu0 %v125
      %469 = vmatprep.subr.bf16.mxu0 0
      %470 = vmatpush1.bf16.msra.mxu0 %v126
      %471 = vmatprep.subr.bf16.mxu0 0
      %472 = vmatpush1.bf16.msra.mxu0 %v127
      %473 = vmatprep.subr.bf16.mxu0 0
      %474 = vmatpush1.bf16.msra.mxu0 %v128
      %475 = vmatprep.subr.bf16.mxu0 0
      %476 = vmatpush1.bf16.msra.mxu0 0
      %477 = vmatprep.subr.bf16.mxu0 0
      %478 = vmatpush1.bf16.msra.mxu0 0
      %479 = vmatprep.subr.bf16.mxu0 0
      %480 = vmatpush1.bf16.msra.mxu0 0
      %481 = vmatprep.subr.bf16.mxu0 0
      %482 = vmatpush1.bf16.msra.mxu0 0
      %483 = vmatprep.subr.bf16.mxu0 0
      %484 = vmatpush1.bf16.msra.mxu0 0
      %485 = vmatprep.subr.bf16.mxu0 0
      %486 = vmatpush1.bf16.msra.mxu0 0
      %487 = vmatprep.subr.bf16.mxu0 0
      %488 = vmatpush1.bf16.msra.mxu0 0
      %489 = vmatprep.subr.bf16.mxu0 0
      %490 = vmatpush1.bf16.msra.mxu0 0
      %491 = vmatprep.mubr.bf16.mxu0 0
      %492 = vmatmul.mubr.bf16.gmra.mrb[0].mxu0 %v458
      %v493 = vpop.f32.mrb[0].mxu0
      %v494 = vadd.f32 0.0, %v493
      %v495 = vpop.f32.mrb[0].mxu0
      %v496 = vpop.f32.mrb[0].mxu0
      %v497 = vpop.f32.mrb[0].mxu0
      %498 = vdwg.mxu0
      %v499 = vadd.f32 %v457, %v494
      %v500 = vtanh.pop %v499
      %501 = vst [vmem:[#allocation2] sm:$0xff] %v500
    $region37: #{tpu_custom_call.1} parent=1 // pred_fallthru
      _
    // Predicated region
    $region38: #{tpu_custom_call.1} parent=1 // pred_check
      %p502 = pneg %p60
    $region39: #{tpu_custom_call.1} parent=1 // pred_check_branch
      %504 = sbr.rel (%p502) target = $region41
    $region40: #{tpu_custom_call.1} parent=1 // pred_region
      %v505 = vld [vmem:[#allocation2] sm:$0xff]
      %v506 = vld [vmem:[#allocation3] sm:$0xf]
      %v507 = vunpack.c.l.bf16 %v506
      %v508 = vpack.c.bf16 %v505, %v505
      %v509 = vld [vmem:[#allocation6] sm:$0xf]
      %v510 = vld [vmem:[#allocation6 + $0x4] sm:$0xf]
      %v511 = vld [vmem:[#allocation6 + $0x8] sm:$0xf]
      %v512 = vld [vmem:[#allocation6 + $0xc] sm:$0xf]
      %v513 = vld [vmem:[#allocation6 + $0x10] sm:$0xf]
      %v514 = vld [vmem:[#allocation6 + $0x14] sm:$0xf]
      %v515 = vld [vmem:[#allocation6 + $0x18] sm:$0xf]
      %v516 = vld [vmem:[#allocation6 + $0x1c] sm:$0xf]
      %v517 = vld [vmem:[#allocation6 + $0x20] sm:$0xf]
      %v518 = vld [vmem:[#allocation6 + $0x24] sm:$0xf]
      %v519 = vld [vmem:[#allocation6 + $0x28] sm:$0xf]
      %v520 = vld [vmem:[#allocation6 + $0x2c] sm:$0xf]
      %v521 = vld [vmem:[#allocation6 + $0x30] sm:$0xf]
      %v522 = vld [vmem:[#allocation6 + $0x34] sm:$0xf]
      %v523 = vld [vmem:[#allocation6 + $0x38] sm:$0xf]
      %v524 = vld [vmem:[#allocation6 + $0x3c] sm:$0xf]
      %v541 = vunpack.c.l.b16 %v509
      %v542 = vunpack.c.l.b16 %v510
      %v543 = vunpack.c.l.b16 %v511
      %v544 = vunpack.c.l.b16 %v512
      %v545 = vunpack.c.l.b16 %v513
      %v546 = vunpack.c.l.b16 %v514
      %v547 = vunpack.c.l.b16 %v515
      %v548 = vunpack.c.l.b16 %v516
      %v549 = vunpack.c.l.b16 %v517
      %v550 = vunpack.c.l.b16 %v518
      %v551 = vunpack.c.l.b16 %v519
      %v552 = vunpack.c.l.b16 %v520
      %v553 = vunpack.c.l.b16 %v521
      %v554 = vunpack.c.l.b16 %v522
      %v555 = vunpack.c.l.b16 %v523
      %v556 = vunpack.c.l.b16 %v524
      %v557 = vpack.c.b16 %v542, %v541
      %v558 = vpack.c.b16 %v544, %v543
      %v559 = vpack.c.b16 %v546, %v545
      %v560 = vpack.c.b16 %v548, %v547
      %v561 = vpack.c.b16 %v550, %v549
      %v562 = vpack.c.b16 %v552, %v551
      %v563 = vpack.c.b16 %v554, %v553
      %v564 = vpack.c.b16 %v556, %v555
      %573 = vmatprep.subr.bf16.mxu0 0
      %574 = vmatpush1.bf16.msra.mxu0 %v557
      %575 = vmatprep.subr.bf16.mxu0 0
      %576 = vmatpush1.bf16.msra.mxu0 %v558
      %577 = vmatprep.subr.bf16.mxu0 0
      %578 = vmatpush1.bf16.msra.mxu0 %v559
      %579 = vmatprep.subr.bf16.mxu0 0
      %580 = vmatpush1.bf16.msra.mxu0 %v560
      %581 = vmatprep.subr.bf16.mxu0 0
      %582 = vmatpush1.bf16.msra.mxu0 %v561
      %583 = vmatprep.subr.bf16.mxu0 0
      %584 = vmatpush1.bf16.msra.mxu0 %v562
      %585 = vmatprep.subr.bf16.mxu0 0
      %586 = vmatpush1.bf16.msra.mxu0 %v563
      %587 = vmatprep.subr.bf16.mxu0 0
      %588 = vmatpush1.bf16.msra.mxu0 %v564
      %589 = vmatprep.subr.bf16.mxu0 0
      %590 = vmatpush1.bf16.msra.mxu0 0
      %591 = vmatprep.subr.bf16.mxu0 0
      %592 = vmatpush1.bf16.msra.mxu0 0
      %593 = vmatprep.subr.bf16.mxu0 0
      %594 = vmatpush1.bf16.msra.mxu0 0
      %595 = vmatprep.subr.bf16.mxu0 0
      %596 = vmatpush1.bf16.msra.mxu0 0
      %597 = vmatprep.subr.bf16.mxu0 0
      %598 = vmatpush1.bf16.msra.mxu0 0
      %599 = vmatprep.subr.bf16.mxu0 0
      %600 = vmatpush1.bf16.msra.mxu0 0
      %601 = vmatprep.subr.bf16.mxu0 0
      %602 = vmatpush1.bf16.msra.mxu0 0
      %603 = vmatprep.subr.bf16.mxu0 0
      %604 = vmatpush1.bf16.msra.mxu0 0
      %605 = vmatprep.mubr.bf16.mxu0 0
      %606 = vmatmul.mubr.bf16.gmra.mrb[0].mxu0 %v508
      %v607 = vpop.f32.mrb[0].mxu0
      %v608 = vadd.f32 0.0, %v607
      %v609 = vpop.f32.mrb[0].mxu0
      %v610 = vpop.f32.mrb[0].mxu0
      %v611 = vpop.f32.mrb[0].mxu0
      %612 = vdwg.mxu0
      %v613 = vadd.f32 %v507, %v608
      %v614 = vtanh.pop %v613
      %s615 = scalar_lea.vmem [#allocation3], 4
      %v616 = vld [vmem:[%s615] sm:$0xf]
      %v617 = vunpack.c.l.bf16 %v616
      %v618 = vpack.c.bf16 %v614, %v614
      %619 = vmatprep.subr.bf16.mxu0 0
      %620 = vmatpush1.bf16.msra.mxu0 %v557
      %621 = vmatprep.subr.bf16.mxu0 0
      %622 = vmatpush1.bf16.msra.mxu0 %v558
      %623 = vmatprep.subr.bf16.mxu0 0
      %624 = vmatpush1.bf16.msra.mxu0 %v559
      %625 = vmatprep.subr.bf16.mxu0 0
      %626 = vmatpush1.bf16.msra.mxu0 %v560
      %627 = vmatprep.subr.bf16.mxu0 0
      %628 = vmatpush1.bf16.msra.mxu0 %v561
      %629 = vmatprep.subr.bf16.mxu0 0
      %630 = vmatpush1.bf16.msra.mxu0 %v562
      %631 = vmatprep.subr.bf16.mxu0 0
      %632 = vmatpush1.bf16.msra.mxu0 %v563
      %633 = vmatprep.subr.bf16.mxu0 0
      %634 = vmatpush1.bf16.msra.mxu0 %v564
      %635 = vmatprep.subr.bf16.mxu0 0
      %636 = vmatpush1.bf16.msra.mxu0 0
      %637 = vmatprep.subr.bf16.mxu0 0
      %638 = vmatpush1.bf16.msra.mxu0 0
      %639 = vmatprep.subr.bf16.mxu0 0
      %640 = vmatpush1.bf16.msra.mxu0 0
      %641 = vmatprep.subr.bf16.mxu0 0
      %642 = vmatpush1.bf16.msra.mxu0 0
      %643 = vmatprep.subr.bf16.mxu0 0
      %644 = vmatpush1.bf16.msra.mxu0 0
      %645 = vmatprep.subr.bf16.mxu0 0
      %646 = vmatpush1.bf16.msra.mxu0 0
      %647 = vmatprep.subr.bf16.mxu0 0
      %648 = vmatpush1.bf16.msra.mxu0 0
      %649 = vmatprep.subr.bf16.mxu0 0
      %650 = vmatpush1.bf16.msra.mxu0 0
      %651 = vmatprep.mubr.bf16.mxu0 0
      %652 = vmatmul.mubr.bf16.gmra.mrb[0].mxu0 %v618
      %v653 = vpop.f32.mrb[0].mxu0
      %v654 = vadd.f32 0.0, %v653
      %v655 = vpop.f32.mrb[0].mxu0
      %v656 = vpop.f32.mrb[0].mxu0
      %v657 = vpop.f32.mrb[0].mxu0
      %658 = vdwg.mxu0
      %v659 = vadd.f32 %v617, %v654
      %v660 = vtanh.pop %v659
      %s661 = scalar_lea.vmem [#allocation3], 8
      %v662 = vld [vmem:[%s661] sm:$0xf]
      %v663 = vunpack.c.l.bf16 %v662
      %v664 = vpack.c.bf16 %v660, %v660
      %665 = vmatprep.subr.bf16.mxu0 0
      %666 = vmatpush1.bf16.msra.mxu0 %v557
      %667 = vmatprep.subr.bf16.mxu0 0
      %668 = vmatpush1.bf16.msra.mxu0 %v558
      %669 = vmatprep.subr.bf16.mxu0 0
      %670 = vmatpush1.bf16.msra.mxu0 %v559
      %671 = vmatprep.subr.bf16.mxu0 0
      %672 = vmatpush1.bf16.msra.mxu0 %v560
      %673 = vmatprep.subr.bf16.mxu0 0
      %674 = vmatpush1.bf16.msra.mxu0 %v561
      %675 = vmatprep.subr.bf16.mxu0 0
      %676 = vmatpush1.bf16.msra.mxu0 %v562
      %677 = vmatprep.subr.bf16.mxu0 0
      %678 = vmatpush1.bf16.msra.mxu0 %v563
      %679 = vmatprep.subr.bf16.mxu0 0
      %680 = vmatpush1.bf16.msra.mxu0 %v564
      %681 = vmatprep.subr.bf16.mxu0 0
      %682 = vmatpush1.bf16.msra.mxu0 0
      %683 = vmatprep.subr.bf16.mxu0 0
      %684 = vmatpush1.bf16.msra.mxu0 0
      %685 = vmatprep.subr.bf16.mxu0 0
      %686 = vmatpush1.bf16.msra.mxu0 0
      %687 = vmatprep.subr.bf16.mxu0 0
      %688 = vmatpush1.bf16.msra.mxu0 0
      %689 = vmatprep.subr.bf16.mxu0 0
      %690 = vmatpush1.bf16.msra.mxu0 0
      %691 = vmatprep.subr.bf16.mxu0 0
      %692 = vmatpush1.bf16.msra.mxu0 0
      %693 = vmatprep.subr.bf16.mxu0 0
      %694 = vmatpush1.bf16.msra.mxu0 0
      %695 = vmatprep.subr.bf16.mxu0 0
      %696 = vmatpush1.bf16.msra.mxu0 0
      %697 = vmatprep.mubr.bf16.mxu0 0
      %698 = vmatmul.mubr.bf16.gmra.mrb[0].mxu0 %v664
      %v699 = vpop.f32.mrb[0].mxu0
      %v700 = vadd.f32 0.0, %v699
      %v701 = vpop.f32.mrb[0].mxu0
      %v702 = vpop.f32.mrb[0].mxu0
      %v703 = vpop.f32.mrb[0].mxu0
      %704 = vdwg.mxu0
      %v705 = vadd.f32 %v663, %v700
      %v706 = vtanh.pop %v705
      %s707 = scalar_lea.vmem [#allocation3], 12
      %v708 = vld [vmem:[%s707] sm:$0xf]
      %v709 = vunpack.c.l.bf16 %v708
      %v710 = vpack.c.bf16 %v706, %v706
      %711 = vmatprep.subr.bf16.mxu0 0
      %712 = vmatpush1.bf16.msra.mxu0 %v557
      %713 = vmatprep.subr.bf16.mxu0 0
      %714 = vmatpush1.bf16.msra.mxu0 %v558
      %715 = vmatprep.subr.bf16.mxu0 0
      %716 = vmatpush1.bf16.msra.mxu0 %v559
      %717 = vmatprep.subr.bf16.mxu0 0
      %718 = vmatpush1.bf16.msra.mxu0 %v560
      %719 = vmatprep.subr.bf16.mxu0 0
      %720 = vmatpush1.bf16.msra.mxu0 %v561
      %721 = vmatprep.subr.bf16.mxu0 0
      %722 = vmatpush1.bf16.msra.mxu0 %v562
      %723 = vmatprep.subr.bf16.mxu0 0
      %724 = vmatpush1.bf16.msra.mxu0 %v563
      %725 = vmatprep.subr.bf16.mxu0 0
      %726 = vmatpush1.bf16.msra.mxu0 %v564
      %727 = vmatprep.subr.bf16.mxu0 0
      %728 = vmatpush1.bf16.msra.mxu0 0
      %729 = vmatprep.subr.bf16.mxu0 0
      %730 = vmatpush1.bf16.msra.mxu0 0
      %731 = vmatprep.subr.bf16.mxu0 0
      %732 = vmatpush1.bf16.msra.mxu0 0
      %733 = vmatprep.subr.bf16.mxu0 0
      %734 = vmatpush1.bf16.msra.mxu0 0
      %735 = vmatprep.subr.bf16.mxu0 0
      %736 = vmatpush1.bf16.msra.mxu0 0
      %737 = vmatprep.subr.bf16.mxu0 0
      %738 = vmatpush1.bf16.msra.mxu0 0
      %739 = vmatprep.subr.bf16.mxu0 0
      %740 = vmatpush1.bf16.msra.mxu0 0
      %741 = vmatprep.subr.bf16.mxu0 0
      %742 = vmatpush1.bf16.msra.mxu0 0
      %743 = vmatprep.mubr.bf16.mxu0 0
      %744 = vmatmul.mubr.bf16.gmra.mrb[0].mxu0 %v710
      %v745 = vpop.f32.mrb[0].mxu0
      %v746 = vadd.f32 0.0, %v745
      %v747 = vpop.f32.mrb[0].mxu0
      %v748 = vpop.f32.mrb[0].mxu0
      %v749 = vpop.f32.mrb[0].mxu0
      %750 = vdwg.mxu0
      %v751 = vadd.f32 %v709, %v746
      %v752 = vtanh.pop %v751
      %s753 = scalar_lea.vmem [#allocation3], 16
      %v754 = vld [vmem:[%s753] sm:$0xf]
      %v755 = vunpack.c.l.bf16 %v754
      %v756 = vpack.c.bf16 %v752, %v752
      %757 = vmatprep.subr.bf16.mxu0 0
      %758 = vmatpush1.bf16.msra.mxu0 %v557
      %759 = vmatprep.subr.bf16.mxu0 0
      %760 = vmatpush1.bf16.msra.mxu0 %v558
      %761 = vmatprep.subr.bf16.mxu0 0
      %762 = vmatpush1.bf16.msra.mxu0 %v559
      %763 = vmatprep.subr.bf16.mxu0 0
      %764 = vmatpush1.bf16.msra.mxu0 %v560
      %765 = vmatprep.subr.bf16.mxu0 0
      %766 = vmatpush1.bf16.msra.mxu0 %v561
      %767 = vmatprep.subr.bf16.mxu0 0
      %768 = vmatpush1.bf16.msra.mxu0 %v562
      %769 = vmatprep.subr.bf16.mxu0 0
      %770 = vmatpush1.bf16.msra.mxu0 %v563
      %771 = vmatprep.subr.bf16.mxu0 0
      %772 = vmatpush1.bf16.msra.mxu0 %v564
      %773 = vmatprep.subr.bf16.mxu0 0
      %774 = vmatpush1.bf16.msra.mxu0 0
      %775 = vmatprep.subr.bf16.mxu0 0
      %776 = vmatpush1.bf16.msra.mxu0 0
      %777 = vmatprep.subr.bf16.mxu0 0
      %778 = vmatpush1.bf16.msra.mxu0 0
      %779 = vmatprep.subr.bf16.mxu0 0
      %780 = vmatpush1.bf16.msra.mxu0 0
      %781 = vmatprep.subr.bf16.mxu0 0
      %782 = vmatpush1.bf16.msra.mxu0 0
      %783 = vmatprep.subr.bf16.mxu0 0
      %784 = vmatpush1.bf16.msra.mxu0 0
      %785 = vmatprep.subr.bf16.mxu0 0
      %786 = vmatpush1.bf16.msra.mxu0 0
      %787 = vmatprep.subr.bf16.mxu0 0
      %788 = vmatpush1.bf16.msra.mxu0 0
      %789 = vmatprep.mubr.bf16.mxu0 0
      %790 = vmatmul.mubr.bf16.gmra.mrb[0].mxu0 %v756
      %v791 = vpop.f32.mrb[0].mxu0
      %v792 = vadd.f32 0.0, %v791
      %v793 = vpop.f32.mrb[0].mxu0
      %v794 = vpop.f32.mrb[0].mxu0
      %v795 = vpop.f32.mrb[0].mxu0
      %796 = vdwg.mxu0
      %v797 = vadd.f32 %v755, %v792
      %v798 = vtanh.pop %v797
      %s799 = scalar_lea.vmem [#allocation3], 20
      %v800 = vld [vmem:[%s799] sm:$0xf]
      %v801 = vunpack.c.l.bf16 %v800
      %v802 = vpack.c.bf16 %v798, %v798
      %803 = vmatprep.subr.bf16.mxu0 0
      %804 = vmatpush1.bf16.msra.mxu0 %v557
      %805 = vmatprep.subr.bf16.mxu0 0
      %806 = vmatpush1.bf16.msra.mxu0 %v558
      %807 = vmatprep.subr.bf16.mxu0 0
      %808 = vmatpush1.bf16.msra.mxu0 %v559
      %809 = vmatprep.subr.bf16.mxu0 0
      %810 = vmatpush1.bf16.msra.mxu0 %v560
      %811 = vmatprep.subr.bf16.mxu0 0
      %812 = vmatpush1.bf16.msra.mxu0 %v561
      %813 = vmatprep.subr.bf16.mxu0 0
      %814 = vmatpush1.bf16.msra.mxu0 %v562
      %815 = vmatprep.subr.bf16.mxu0 0
      %816 = vmatpush1.bf16.msra.mxu0 %v563
      %817 = vmatprep.subr.bf16.mxu0 0
      %818 = vmatpush1.bf16.msra.mxu0 %v564
      %819 = vmatprep.subr.bf16.mxu0 0
      %820 = vmatpush1.bf16.msra.mxu0 0
      %821 = vmatprep.subr.bf16.mxu0 0
      %822 = vmatpush1.bf16.msra.mxu0 0
      %823 = vmatprep.subr.bf16.mxu0 0
      %824 = vmatpush1.bf16.msra.mxu0 0
      %825 = vmatprep.subr.bf16.mxu0 0
      %826 = vmatpush1.bf16.msra.mxu0 0
      %827 = vmatprep.subr.bf16.mxu0 0
      %828 = vmatpush1.bf16.msra.mxu0 0
      %829 = vmatprep.subr.bf16.mxu0 0
      %830 = vmatpush1.bf16.msra.mxu0 0
      %831 = vmatprep.subr.bf16.mxu0 0
      %832 = vmatpush1.bf16.msra.mxu0 0
      %833 = vmatprep.subr.bf16.mxu0 0
      %834 = vmatpush1.bf16.msra.mxu0 0
      %835 = vmatprep.mubr.bf16.mxu0 0
      %836 = vmatmul.mubr.bf16.gmra.mrb[0].mxu0 %v802
      %v837 = vpop.f32.mrb[0].mxu0
      %v838 = vadd.f32 0.0, %v837
      %v839 = vpop.f32.mrb[0].mxu0
      %v840 = vpop.f32.mrb[0].mxu0
      %v841 = vpop.f32.mrb[0].mxu0
      %842 = vdwg.mxu0
      %v843 = vadd.f32 %v801, %v838
      %v844 = vtanh.pop %v843
      %s845 = scalar_lea.vmem [#allocation3], 24
      %v846 = vld [vmem:[%s845] sm:$0xf]
      %v847 = vunpack.c.l.bf16 %v846
      %v848 = vpack.c.bf16 %v844, %v844
      %849 = vmatprep.subr.bf16.mxu0 0
      %850 = vmatpush1.bf16.msra.mxu0 %v557
      %851 = vmatprep.subr.bf16.mxu0 0
      %852 = vmatpush1.bf16.msra.mxu0 %v558
      %853 = vmatprep.subr.bf16.mxu0 0
      %854 = vmatpush1.bf16.msra.mxu0 %v559
      %855 = vmatprep.subr.bf16.mxu0 0
      %856 = vmatpush1.bf16.msra.mxu0 %v560
      %857 = vmatprep.subr.bf16.mxu0 0
      %858 = vmatpush1.bf16.msra.mxu0 %v561
      %859 = vmatprep.subr.bf16.mxu0 0
      %860 = vmatpush1.bf16.msra.mxu0 %v562
      %861 = vmatprep.subr.bf16.mxu0 0
      %862 = vmatpush1.bf16.msra.mxu0 %v563
      %863 = vmatprep.subr.bf16.mxu0 0
      %864 = vmatpush1.bf16.msra.mxu0 %v564
      %865 = vmatprep.subr.bf16.mxu0 0
      %866 = vmatpush1.bf16.msra.mxu0 0
      %867 = vmatprep.subr.bf16.mxu0 0
      %868 = vmatpush1.bf16.msra.mxu0 0
      %869 = vmatprep.subr.bf16.mxu0 0
      %870 = vmatpush1.bf16.msra.mxu0 0
      %871 = vmatprep.subr.bf16.mxu0 0
      %872 = vmatpush1.bf16.msra.mxu0 0
      %873 = vmatprep.subr.bf16.mxu0 0
      %874 = vmatpush1.bf16.msra.mxu0 0
      %875 = vmatprep.subr.bf16.mxu0 0
      %876 = vmatpush1.bf16.msra.mxu0 0
      %877 = vmatprep.subr.bf16.mxu0 0
      %878 = vmatpush1.bf16.msra.mxu0 0
      %879 = vmatprep.subr.bf16.mxu0 0
      %880 = vmatpush1.bf16.msra.mxu0 0
      %881 = vmatprep.mubr.bf16.mxu0 0
      %882 = vmatmul.mubr.bf16.gmra.mrb[0].mxu0 %v848
      %v883 = vpop.f32.mrb[0].mxu0
      %v884 = vadd.f32 0.0, %v883
      %v885 = vpop.f32.mrb[0].mxu0
      %v886 = vpop.f32.mrb[0].mxu0
      %v887 = vpop.f32.mrb[0].mxu0
      %888 = vdwg.mxu0
      %v889 = vadd.f32 %v847, %v884
      %v890 = vtanh.pop %v889
      %s891 = scalar_lea.vmem [#allocation3], 28
      %v892 = vld [vmem:[%s891] sm:$0xf]
      %v893 = vunpack.c.l.bf16 %v892
      %v894 = vpack.c.bf16 %v890, %v890
      %895 = vmatprep.subr.bf16.mxu0 0
      %896 = vmatpush1.bf16.msra.mxu0 %v557
      %897 = vmatprep.subr.bf16.mxu0 0
      %898 = vmatpush1.bf16.msra.mxu0 %v558
      %899 = vmatprep.subr.bf16.mxu0 0
      %900 = vmatpush1.bf16.msra.mxu0 %v559
      %901 = vmatprep.subr.bf16.mxu0 0
      %902 = vmatpush1.bf16.msra.mxu0 %v560
      %903 = vmatprep.subr.bf16.mxu0 0
      %904 = vmatpush1.bf16.msra.mxu0 %v561
      %905 = vmatprep.subr.bf16.mxu0 0
      %906 = vmatpush1.bf16.msra.mxu0 %v562
      %907 = vmatprep.subr.bf16.mxu0 0
      %908 = vmatpush1.bf16.msra.mxu0 %v563
      %909 = vmatprep.subr.bf16.mxu0 0
      %910 = vmatpush1.bf16.msra.mxu0 %v564
      %911 = vmatprep.subr.bf16.mxu0 0
      %912 = vmatpush1.bf16.msra.mxu0 0
      %913 = vmatprep.subr.bf16.mxu0 0
      %914 = vmatpush1.bf16.msra.mxu0 0
      %915 = vmatprep.subr.bf16.mxu0 0
      %916 = vmatpush1.bf16.msra.mxu0 0
      %917 = vmatprep.subr.bf16.mxu0 0
      %918 = vmatpush1.bf16.msra.mxu0 0
      %919 = vmatprep.subr.bf16.mxu0 0
      %920 = vmatpush1.bf16.msra.mxu0 0
      %921 = vmatprep.subr.bf16.mxu0 0
      %922 = vmatpush1.bf16.msra.mxu0 0
      %923 = vmatprep.subr.bf16.mxu0 0
      %924 = vmatpush1.bf16.msra.mxu0 0
      %925 = vmatprep.subr.bf16.mxu0 0
      %926 = vmatpush1.bf16.msra.mxu0 0
      %927 = vmatprep.mubr.bf16.mxu0 0
      %928 = vmatmul.mubr.bf16.gmra.mrb[0].mxu0 %v894
      %v929 = vpop.f32.mrb[0].mxu0
      %v930 = vadd.f32 0.0, %v929
      %v931 = vpop.f32.mrb[0].mxu0
      %v932 = vpop.f32.mrb[0].mxu0
      %v933 = vpop.f32.mrb[0].mxu0
      %934 = vdwg.mxu0
      %v935 = vadd.f32 %v893, %v930
      %v936 = vtanh.pop %v935
      %937 = vst [vmem:[#allocation2] sm:$0xff] %v936
      %v938 = vpack.c.bf16 %v936, %v936
      %v939 = vld [vmem:[#allocation8] sm:$0xf]
      %v940 = vld [vmem:[#allocation8 + $0x4] sm:$0xf]
      %v941 = vld [vmem:[#allocation8 + $0x8] sm:$0xf]
      %v942 = vld [vmem:[#allocation8 + $0xc] sm:$0xf]
      %v943 = vld [vmem:[#allocation8 + $0x10] sm:$0xf]
      %v944 = vld [vmem:[#allocation8 + $0x14] sm:$0xf]
      %v945 = vld [vmem:[#allocation8 + $0x18] sm:$0xf]
      %v946 = vld [vmem:[#allocation8 + $0x1c] sm:$0xf]
      %v947 = vld [vmem:[#allocation8 + $0x20] sm:$0xf]
      %v948 = vld [vmem:[#allocation8 + $0x24] sm:$0xf]
      %v949 = vld [vmem:[#allocation8 + $0x28] sm:$0xf]
      %v950 = vld [vmem:[#allocation8 + $0x2c] sm:$0xf]
      %v951 = vld [vmem:[#allocation8 + $0x30] sm:$0xf]
      %v952 = vld [vmem:[#allocation8 + $0x34] sm:$0xf]
      %v953 = vld [vmem:[#allocation8 + $0x38] sm:$0xf]
      %v954 = vld [vmem:[#allocation8 + $0x3c] sm:$0xf]
      %v955 = vld [vmem:[%s3] sm:$0x1]
      %v957 = vlaneseq
      %v958 = vshrl.u32 %v957, 7
      %v959 = vsub.s32 0, %v958
      %v960 = vrot.slane %v955, %v959
      %v978 = vunpack.c.l.b16 %v939
      %v979 = vunpack.c.l.b16 %v940
      %v980 = vunpack.c.l.b16 %v941
      %v981 = vunpack.c.l.b16 %v942
      %v982 = vunpack.c.l.b16 %v943
      %v983 = vunpack.c.l.b16 %v944
      %v984 = vunpack.c.l.b16 %v945
      %v985 = vunpack.c.l.b16 %v946
      %v986 = vunpack.c.l.b16 %v947
      %v987 = vunpack.c.l.b16 %v948
      %v988 = vunpack.c.l.b16 %v949
      %v989 = vunpack.c.l.b16 %v950
      %v990 = vunpack.c.l.b16 %v951
      %v991 = vunpack.c.l.b16 %v952
      %v992 = vunpack.c.l.b16 %v953
      %v993 = vunpack.c.l.b16 %v954
      %v994 = vpack.c.b16 %v979, %v978
      %v995 = vpack.c.b16 %v981, %v980
      %v996 = vpack.c.b16 %v983, %v982
      %v997 = vpack.c.b16 %v985, %v984
      %v998 = vpack.c.b16 %v987, %v986
      %v999 = vpack.c.b16 %v989, %v988
      %v1000 = vpack.c.b16 %v991, %v990
      %v1001 = vpack.c.b16 %v993, %v992
      %1010 = vmatprep.subr.bf16.mxu0 0
      %1011 = vmatpush1.bf16.msra.mxu0 %v994
      %1012 = vmatprep.subr.bf16.mxu0 0
      %1013 = vmatpush1.bf16.msra.mxu0 %v995
      %1014 = vmatprep.subr.bf16.mxu0 0
      %1015 = vmatpush1.bf16.msra.mxu0 %v996
      %1016 = vmatprep.subr.bf16.mxu0 0
      %1017 = vmatpush1.bf16.msra.mxu0 %v997
      %1018 = vmatprep.subr.bf16.mxu0 0
      %1019 = vmatpush1.bf16.msra.mxu0 %v998
      %1020 = vmatprep.subr.bf16.mxu0 0
      %1021 = vmatpush1.bf16.msra.mxu0 %v999
      %1022 = vmatprep.subr.bf16.mxu0 0
      %1023 = vmatpush1.bf16.msra.mxu0 %v1000
      %1024 = vmatprep.subr.bf16.mxu0 0
      %1025 = vmatpush1.bf16.msra.mxu0 %v1001
      %1026 = vmatprep.subr.bf16.mxu0 0
      %1027 = vmatpush1.bf16.msra.mxu0 0
      %1028 = vmatprep.subr.bf16.mxu0 0
      %1029 = vmatpush1.bf16.msra.mxu0 0
      %1030 = vmatprep.subr.bf16.mxu0 0
      %1031 = vmatpush1.bf16.msra.mxu0 0
      %1032 = vmatprep.subr.bf16.mxu0 0
      %1033 = vmatpush1.bf16.msra.mxu0 0
      %1034 = vmatprep.subr.bf16.mxu0 0
      %1035 = vmatpush1.bf16.msra.mxu0 0
      %1036 = vmatprep.subr.bf16.mxu0 0
      %1037 = vmatpush1.bf16.msra.mxu0 0
      %1038 = vmatprep.subr.bf16.mxu0 0
      %1039 = vmatpush1.bf16.msra.mxu0 0
      %1040 = vmatprep.subr.bf16.mxu0 0
      %1041 = vmatpush1.bf16.msra.mxu0 0
      %1042 = vmatprep.mubr.bf16.mxu0 0
      %1043 = vmatmul.mubr.bf16.gmra.mrb[0].mxu0 %v938
      %v1044 = vpop.f32.mrb[0].mxu0
      %v1045 = vadd.f32 %v960, %v1044
      %v1046 = vpop.f32.mrb[0].mxu0
      %v1047 = vpop.f32.mrb[0].mxu0
      %v1048 = vpop.f32.mrb[0].mxu0
      %1049 = vdwg.mxu0
      %1050 = vst [vmem:[#allocation9] sm:$0xff] %v1045
    $region41: #{tpu_custom_call.1} parent=1 // pred_fallthru
      _
    // Predicated region
    $region42: #{tpu_custom_call.1} parent=1 // pred_check
      _
    $region43: #{tpu_custom_call.1} parent=1 // pred_check_branch
      %1052 = sbr.rel (0) target = $region45
    $region44: #{tpu_custom_call.1} parent=1 // pred_region
      %s1054 = ssub.s32 128, 128
      %1055 = vsyncadd [#allocation5], %s1054
      %s1057 = sshll.u32 [#allocation9], 4
      %s1058 = int_to_ptr.vmem [resolvable:$true] %s1057
      %1060 = dma.vmem_to_hbm [thread:$0]  %s1058, 128, %s4, [#allocation5]
    $region45: #{tpu_custom_call.1} parent=1 // pred_fallthru
      _
    // Predicated region
    $region46: #{tpu_custom_call.1} parent=1 // pred_check
      _
    $region47: #{tpu_custom_call.1} parent=1 // pred_check_branch
      %1062 = sbr.rel (0) target = $region49
    $region48: #{tpu_custom_call.1} parent=1 // pred_region
      %1063 = dma.done [#allocation5], 128
    $region49: #{tpu_custom_call.1} parent=1 // pred_fallthru
      _
    %1064 = vsyncpa [#allocation4], 1
    %1065 = vsyncpa [#allocation7], 1
    %1066 = vsyncpa [#allocation5], 1

</llo_original>
